<compile_context>
chip_gen: v7x
topology: tpu7x:2x2x1
jax: 0.10.0
libtpu: 0.0.40
codegen_flags: <defaults>
</compile_context>

<pallas_src>
import functools

import jax
import jax.numpy as jnp
from jax.experimental import pallas as pl
from jax.experimental.pallas import tpu as pltpu

EPS = 1e-5


def _basic_block_kernel(xe_ref, b1_ref, b2_ref, g1_ref, be1_ref, g2_ref, be2_ref,
                        fold_ref, foldt_ref, out_ref, h1e_ref, *, H):
    R = xe_ref.shape[0] - 2          # N*H rows (xe has a 1-row zero halo each side)
    WC = out_ref.shape[1]            # W * Cmid  (lane dim, 128 for the test shape)
    C = g1_ref.shape[1]              # Cmid
    W = WC // C
    inv_m = 1.0 / float(R * W)       # 1 / (N*H*W) for batch statistics

    # Per-output-row masks for the H-direction taps: zero padding at image edges
    # and no leakage between images inside the flat N*H row dimension.
    row = jax.lax.broadcasted_iota(jnp.int32, (R, 1), 0)
    h = row % H
    not_top = h != 0
    not_bot = h != (H - 1)

    def conv3x3(xe, b_ref):
        # xe: (R+2, K) slab with zero halo rows; b_ref: (3, K, WC) banded weights.
        x_ct = xe[1:R + 1, :]                              # input rows r   (ky=1)
        x_up = jnp.where(not_top, xe[0:R, :], 0.0)         # input rows r-1 (ky=0)
        x_dn = jnp.where(not_bot, xe[2:R + 2, :], 0.0)     # input rows r+1 (ky=2)
        acc = jnp.dot(x_ct, b_ref[1], preferred_element_type=jnp.float32)
        acc = acc + jnp.dot(x_up, b_ref[0], preferred_element_type=jnp.float32)
        acc = acc + jnp.dot(x_dn, b_ref[2], preferred_element_type=jnp.float32)
        return acc                                         # (R, WC) f32

    def batchnorm(acc, g_ref, be_ref):
        # Fused single-pass batch stats (biased variance) on the lane-dense slab.
        col_s = jnp.sum(acc, axis=0, keepdims=True)             # (1, WC)
        col_ss = jnp.sum(acc * acc, axis=0, keepdims=True)      # (1, WC)
        ch_s = jnp.dot(col_s, fold_ref[...], preferred_element_type=jnp.float32)
        ch_ss = jnp.dot(col_ss, fold_ref[...], preferred_element_type=jnp.float32)
        mean = ch_s * inv_m                                     # (1, C)
        var = ch_ss * inv_m - mean * mean                       # biased variance
        scale_c = g_ref[...] * jax.lax.rsqrt(var + EPS)         # (1, C)
        shift_c = be_ref[...] - mean * scale_c
        scale = jnp.dot(scale_c, foldt_ref[...], preferred_element_type=jnp.float32)
        shift = jnp.dot(shift_c, foldt_ref[...], preferred_element_type=jnp.float32)
        return acc * scale + shift                              # (R, WC)

    # conv1 + bn1 + ReLU (the conv2 Sequential's leading ReLU is a no-op: removed)
    acc1 = conv3x3(xe_ref[...], b1_ref)
    h1 = jnp.maximum(batchnorm(acc1, g1_ref, be1_ref), 0.0)

    # 1-row zero halo around h1 for conv2's H-direction taps:
    # only the two border rows are zeroed (no full-buffer zero + reload).
    h1e_ref[0:1, :] = jnp.zeros((1, WC), jnp.float32)
    h1e_ref[R + 1:R + 2, :] = jnp.zeros((1, WC), jnp.float32)
    h1e_ref[1:R + 1, :] = h1

    # conv2 + bn2
    acc2 = conv3x3(h1e_ref[...], b2_ref)
    out_ref[...] = batchnorm(acc2, g2_ref, be2_ref).astype(out_ref.dtype)


def _banded_weights(w, W):
    """(Cout, Cin, 3, 3) conv weight -> (3, W*Cin, W*Cout) banded matmul weights.

    B[ky, w_in*Cin + c_in, w_out*Cout + c_out] = w[c_out, c_in, ky, w_in-w_out+1]
    (zero where the kx tap is out of range), so one matmul against a
    (rows, W*Cin) activation slab performs all kx taps plus the W-direction
    zero padding at once, with a lane-dense (W*Cout) output.
    """
    cout, cin, _, _ = w.shape
    wk = jnp.transpose(w, (2, 3, 1, 0)).astype(jnp.float32)     # (ky, kx, Cin, Cout)
    blocks = []
    for ky in range(3):
        bk = jnp.zeros((W, cin, W, cout), jnp.float32)
        for kx in range(3):
            sel = jnp.eye(W, W, k=1 - kx, dtype=jnp.float32)    # w_out == w_in + 1 - kx
            bk = bk + jnp.einsum('pq,io->piqo', sel, wk[ky, kx])
        blocks.append(bk.reshape(W * cin, W * cout))
    return jnp.stack(blocks, axis=0)


@jax.jit
def basic_block_pallas(x_nchw, w1, g1, b1, w2, g2, b2):
    """x_nchw: (N, Cin, H, W); w1: (Cmid, Cin, 3, 3); w2: (Cmid, Cmid, 3, 3)."""
    N, Cin, H, W = x_nchw.shape
    Cmid = w1.shape[0]
    R = N * H

    # NCHW -> lane-dense (N*H, W*Cin) rows, plus one zero halo row on each side
    # for the H-direction conv taps.  The old full H/W spatial zero-padding is
    # folded into the banded weights / row masks instead.
    x_rows = jnp.transpose(x_nchw, (0, 2, 3, 1)).reshape(R, W * Cin)
    xe = jnp.pad(x_rows.astype(jnp.float32), ((1, 1), (0, 0)))

    b1k = _banded_weights(w1, W)                  # (3, W*Cin,  W*Cmid)
    b2k = _banded_weights(w2, W)                  # (3, W*Cmid, W*Cmid)

    # per-channel <-> lane-dense fold matrices for the fused BN statistics
    fold = jnp.tile(jnp.eye(Cmid, dtype=jnp.float32), (W, 1))   # (W*Cmid, Cmid)
    foldt = fold.T                                              # (Cmid, W*Cmid)

    g1r = g1.reshape(1, Cmid).astype(jnp.float32)
    be1r = b1.reshape(1, Cmid).astype(jnp.float32)
    g2r = g2.reshape(1, Cmid).astype(jnp.float32)
    be2r = b2.reshape(1, Cmid).astype(jnp.float32)

    vmem = pl.BlockSpec(memory_space=pltpu.MemorySpace.VMEM)
    out_rows = pl.pallas_call(
        functools.partial(_basic_block_kernel, H=H),
        out_shape=jax.ShapeDtypeStruct((R, W * Cmid), jnp.float32),  # lane-dense
        in_specs=[vmem] * 9,
        out_specs=vmem,
        scratch_shapes=[pltpu.VMEM((R + 2, W * Cmid), jnp.float32)],
    )(xe, b1k, b2k, g1r, be1r, g2r, be2r, fold, foldt)

    # (N*H, W*Cmid) -> NCHW to match the PyTorch output convention.
    return jnp.transpose(out_rows.reshape(N, H, W, Cmid), (0, 3, 1, 2))


def _reference(x_nchw, w1, g1, b1, w2, g2, b2):
    """Pure-JAX reference mirroring the PyTorch forward (training-mode BN)."""
    def conv3x3(x, w):
        return jax.lax.conv_general_dilated(
            x, w, window_strides=(1, 1), padding=((1, 1), (1, 1)),
            dimension_numbers=("NCHW", "OIHW", "NCHW"))

    def bn(x, g, b):
        m = jnp.mean(x, axis=(0, 2, 3), keepdims=True)
        v = jnp.mean((x - m) ** 2, axis=(0, 2, 3), keepdims=True)
        return (x - m) * jax.lax.rsqrt(v + EPS) * g.reshape(1, -1, 1, 1) \
            + b.reshape(1, -1, 1, 1)

    out = conv3x3(x_nchw, w1)
    out = bn(out, g1, b1)
    out = jax.nn.relu(out)
    out = jax.nn.relu(out)          # conv2's Sequential ReLU (no-op)
    out = conv3x3(out, w2)
    return bn(out, g2, b2)


if __name__ == "__main__":
    key = jax.random.PRNGKey(0)
    k_x, k_w1, k_w2, k_g1, k_b1, k_g2, k_b2 = jax.random.split(key, 7)

    N, Cin, Cmid, H, W = 2, 4, 8, 16, 16   # in_planes=4, planes=8, stride=1

    x = jax.random.normal(k_x, (N, Cin, H, W), jnp.float32)
    w1 = jax.random.normal(k_w1, (Cmid, Cin, 3, 3), jnp.float32) * 0.2
    w2 = jax.random.normal(k_w2, (Cmid, Cmid, 3, 3), jnp.float32) * 0.2
    g1 = 1.0 + 0.1 * jax.random.normal(k_g1, (Cmid,), jnp.float32)
    b1 = 0.1 * jax.random.normal(k_b1, (Cmid,), jnp.float32)
    g2 = 1.0 + 0.1 * jax.random.normal(k_g2, (Cmid,), jnp.float32)
    b2 = 0.1 * jax.random.normal(k_b2, (Cmid,), jnp.float32)

    y = basic_block_pallas(x, w1, g1, b1, w2, g2, b2)
    y = jax.block_until_ready(y)

    y_ref = _reference(x, w1, g1, b1, w2, g2, b2)
    assert y.shape == (N, Cmid, H, W)
    assert jnp.allclose(y, y_ref, rtol=1e-3, atol=1e-3), \
        f"max err {jnp.max(jnp.abs(y - y_ref))}"

    print("KERNEL_OK")
</pallas_src>

<mosaic_0001>
module attributes {stable_mosaic.version = 11 : i64} {
  func.func @_basic_block_kernel(%arg0: memref<34x64xf32, #tpu.memory_space<vmem>>, %arg1: memref<3x64x128xf32, #tpu.memory_space<vmem>>, %arg2: memref<3x128x128xf32, #tpu.memory_space<vmem>>, %arg3: memref<1x8xf32, #tpu.memory_space<vmem>>, %arg4: memref<1x8xf32, #tpu.memory_space<vmem>>, %arg5: memref<1x8xf32, #tpu.memory_space<vmem>>, %arg6: memref<1x8xf32, #tpu.memory_space<vmem>>, %arg7: memref<128x8xf32, #tpu.memory_space<vmem>>, %arg8: memref<8x128xf32, #tpu.memory_space<vmem>>, %arg9: memref<32x128xf32, #tpu.memory_space<vmem>>, %arg10: memref<34x128xf32, #tpu.memory_space<vmem>>) attributes {dimension_semantics = [], scalar_prefetch = 0 : i64, scratch_operands = 1 : i64, tpu.core_type = #tpu.core_type<tc>} {
    %0 = tpu.iota {dimensions = array<i32: 0>} : vector<32x1xi32>
    %c16_i32 = arith.constant 16 : i32
    %c0_i32 = arith.constant 0 : i32
    %1 = arith.cmpi eq, %c16_i32, %c0_i32 : i32
    %c1_i32 = arith.constant 1 : i32
    %2 = arith.select %1, %c1_i32, %c16_i32 : i32
    %3 = vector.broadcast %2 : i32 to vector<32x1xi32>
    %4 = arith.remsi %0, %3 : vector<32x1xi32>
    %c0_i32_0 = arith.constant 0 : i32
    %5 = vector.broadcast %c0_i32_0 : i32 to vector<32x1xi32>
    %6 = arith.cmpi ne, %4, %5 : vector<32x1xi32>
    %c0_i32_1 = arith.constant 0 : i32
    %7 = vector.broadcast %c0_i32_1 : i32 to vector<32x1xi32>
    %8 = arith.cmpi slt, %4, %7 : vector<32x1xi32>
    %c0_i32_2 = arith.constant 0 : i32
    %9 = arith.cmpi slt, %2, %c0_i32_2 : i32
    %10 = vector.broadcast %9 : i1 to vector<32x1xi1>
    %11 = vector.broadcast %10 : vector<32x1xi1> to vector<32x1xi1>
    %12 = arith.xori %8, %11 : vector<32x1xi1>
    %13 = arith.andi %12, %6 : vector<32x1xi1>
    %14 = vector.broadcast %2 : i32 to vector<32x1xi32>
    %15 = arith.addi %4, %14 : vector<32x1xi32>
    %16 = arith.select %13, %15, %4 : vector<32x1xi1>, vector<32x1xi32>
    %c0_i32_3 = arith.constant 0 : i32
    %17 = vector.broadcast %c0_i32_3 : i32 to vector<32x1xi32>
    %18 = arith.cmpi ne, %16, %17 : vector<32x1xi32>
    %c15_i32 = arith.constant 15 : i32
    %19 = vector.broadcast %c15_i32 : i32 to vector<32x1xi32>
    %20 = arith.cmpi ne, %16, %19 : vector<32x1xi32>
    %c0 = arith.constant 0 : index
    %c0_4 = arith.constant 0 : index
    %21 = vector.load %arg0[%c0, %c0_4] : memref<34x64xf32, #tpu.memory_space<vmem>>, vector<34x64xf32>
    %22 = vector.extract_strided_slice %21 {offsets = [1, 0], sizes = [32, 64], strides = [1, 1]} : vector<34x64xf32> to vector<32x64xf32>
    %23 = vector.extract_strided_slice %21 {offsets = [0, 0], sizes = [32, 64], strides = [1, 1]} : vector<34x64xf32> to vector<32x64xf32>
    %cst = arith.constant 0.000000e+00 : f32
    %24 = vector.shape_cast %18 : vector<32x1xi1> to vector<32x1xi1>
    %25 = vector.broadcast %24 : vector<32x1xi1> to vector<32x64xi1>
    %26 = vector.broadcast %cst : f32 to vector<32x64xf32>
    %27 = arith.select %25, %23, %26 : vector<32x64xi1>, vector<32x64xf32>
    %28 = vector.extract_strided_slice %21 {offsets = [2, 0], sizes = [32, 64], strides = [1, 1]} : vector<34x64xf32> to vector<32x64xf32>
    %cst_5 = arith.constant 0.000000e+00 : f32
    %29 = vector.shape_cast %20 : vector<32x1xi1> to vector<32x1xi1>
    %30 = vector.broadcast %29 : vector<32x1xi1> to vector<32x64xi1>
    %31 = vector.broadcast %cst_5 : f32 to vector<32x64xf32>
    %32 = arith.select %30, %28, %31 : vector<32x64xi1>, vector<32x64xf32>
    %c1 = arith.constant 1 : index
    %c0_6 = arith.constant 0 : index
    %c0_7 = arith.constant 0 : index
    %33 = vector.load %arg1[%c1, %c0_6, %c0_7] : memref<3x64x128xf32, #tpu.memory_space<vmem>>, vector<1x64x128xf32>
    %34 = vector.shape_cast %33 : vector<1x64x128xf32> to vector<64x128xf32>
    %cst_8 = arith.constant dense<0.000000e+00> : vector<32x128xf32>
    %35 = tpu.matmul %22, %34, %cst_8 {dimension_numbers = #tpu.dot_dimension_numbers<[1], [0], [0], [1], [0, 0, 1, 1], [], []>} : vector<32x64xf32>, vector<64x128xf32>, vector<32x128xf32> -> vector<32x128xf32>
    %c0_9 = arith.constant 0 : index
    %c0_10 = arith.constant 0 : index
    %c0_11 = arith.constant 0 : index
    %36 = vector.load %arg1[%c0_9, %c0_10, %c0_11] : memref<3x64x128xf32, #tpu.memory_space<vmem>>, vector<1x64x128xf32>
    %37 = vector.shape_cast %36 : vector<1x64x128xf32> to vector<64x128xf32>
    %cst_12 = arith.constant dense<0.000000e+00> : vector<32x128xf32>
    %38 = tpu.matmul %27, %37, %cst_12 {dimension_numbers = #tpu.dot_dimension_numbers<[1], [0], [0], [1], [0, 0, 1, 1], [], []>} : vector<32x64xf32>, vector<64x128xf32>, vector<32x128xf32> -> vector<32x128xf32>
    %39 = arith.addf %35, %38 : vector<32x128xf32>
    %c2 = arith.constant 2 : index
    %c0_13 = arith.constant 0 : index
    %c0_14 = arith.constant 0 : index
    %40 = vector.load %arg1[%c2, %c0_13, %c0_14] : memref<3x64x128xf32, #tpu.memory_space<vmem>>, vector<1x64x128xf32>
    %41 = vector.shape_cast %40 : vector<1x64x128xf32> to vector<64x128xf32>
    %cst_15 = arith.constant dense<0.000000e+00> : vector<32x128xf32>
    %42 = tpu.matmul %32, %41, %cst_15 {dimension_numbers = #tpu.dot_dimension_numbers<[1], [0], [0], [1], [0, 0, 1, 1], [], []>} : vector<32x64xf32>, vector<64x128xf32>, vector<32x128xf32> -> vector<32x128xf32>
    %43 = arith.addf %39, %42 : vector<32x128xf32>
    %cst_16 = arith.constant dense<0.000000e+00> : vector<128xf32>
    %44 = vector.multi_reduction <add>, %43, %cst_16 [0] : vector<32x128xf32> to vector<128xf32>
    %45 = vector.shape_cast %44 : vector<128xf32> to vector<1x128xf32>
    %46 = arith.mulf %43, %43 : vector<32x128xf32>
    %cst_17 = arith.constant dense<0.000000e+00> : vector<128xf32>
    %47 = vector.multi_reduction <add>, %46, %cst_17 [0] : vector<32x128xf32> to vector<128xf32>
    %48 = vector.shape_cast %47 : vector<128xf32> to vector<1x128xf32>
    %c0_18 = arith.constant 0 : index
    %c0_19 = arith.constant 0 : index
    %49 = vector.load %arg7[%c0_18, %c0_19] : memref<128x8xf32, #tpu.memory_space<vmem>>, vector<128x8xf32>
    %cst_20 = arith.constant dense<0.000000e+00> : vector<1x8xf32>
    %50 = tpu.matmul %45, %49, %cst_20 {dimension_numbers = #tpu.dot_dimension_numbers<[1], [0], [0], [1], [0, 0, 1, 1], [], []>} : vector<1x128xf32>, vector<128x8xf32>, vector<1x8xf32> -> vector<1x8xf32>
    %c0_21 = arith.constant 0 : index
    %c0_22 = arith.constant 0 : index
    %51 = vector.load %arg7[%c0_21, %c0_22] : memref<128x8xf32, #tpu.memory_space<vmem>>, vector<128x8xf32>
    %cst_23 = arith.constant dense<0.000000e+00> : vector<1x8xf32>
    %52 = tpu.matmul %48, %51, %cst_23 {dimension_numbers = #tpu.dot_dimension_numbers<[1], [0], [0], [1], [0, 0, 1, 1], [], []>} : vector<1x128xf32>, vector<128x8xf32>, vector<1x8xf32> -> vector<1x8xf32>
    %cst_24 = arith.constant 0.001953125 : f32
    %53 = vector.broadcast %cst_24 : f32 to vector<1x8xf32>
    %54 = arith.mulf %50, %53 : vector<1x8xf32>
    %cst_25 = arith.constant 0.001953125 : f32
    %55 = vector.broadcast %cst_25 : f32 to vector<1x8xf32>
    %56 = arith.mulf %52, %55 : vector<1x8xf32>
    %57 = arith.mulf %54, %54 : vector<1x8xf32>
    %58 = arith.subf %56, %57 : vector<1x8xf32>
    %c0_26 = arith.constant 0 : index
    %c0_27 = arith.constant 0 : index
    %59 = vector.load %arg3[%c0_26, %c0_27] : memref<1x8xf32, #tpu.memory_space<vmem>>, vector<1x8xf32>
    %cst_28 = arith.constant 9.99999974E-6 : f32
    %60 = vector.broadcast %cst_28 : f32 to vector<1x8xf32>
    %61 = arith.addf %58, %60 : vector<1x8xf32>
    %62 = math.rsqrt %61 : vector<1x8xf32>
    %63 = arith.mulf %59, %62 : vector<1x8xf32>
    %c0_29 = arith.constant 0 : index
    %c0_30 = arith.constant 0 : index
    %64 = vector.load %arg4[%c0_29, %c0_30] : memref<1x8xf32, #tpu.memory_space<vmem>>, vector<1x8xf32>
    %65 = arith.mulf %54, %63 : vector<1x8xf32>
    %66 = arith.subf %64, %65 : vector<1x8xf32>
    %c0_31 = arith.constant 0 : index
    %c0_32 = arith.constant 0 : index
    %67 = vector.load %arg8[%c0_31, %c0_32] : memref<8x128xf32, #tpu.memory_space<vmem>>, vector<8x128xf32>
    %cst_33 = arith.constant dense<0.000000e+00> : vector<1x128xf32>
    %68 = tpu.matmul %63, %67, %cst_33 {dimension_numbers = #tpu.dot_dimension_numbers<[1], [0], [0], [1], [0, 0, 1, 1], [], []>} : vector<1x8xf32>, vector<8x128xf32>, vector<1x128xf32> -> vector<1x128xf32>
    %c0_34 = arith.constant 0 : index
    %c0_35 = arith.constant 0 : index
    %69 = vector.load %arg8[%c0_34, %c0_35] : memref<8x128xf32, #tpu.memory_space<vmem>>, vector<8x128xf32>
    %cst_36 = arith.constant dense<0.000000e+00> : vector<1x128xf32>
    %70 = tpu.matmul %66, %69, %cst_36 {dimension_numbers = #tpu.dot_dimension_numbers<[1], [0], [0], [1], [0, 0, 1, 1], [], []>} : vector<1x8xf32>, vector<8x128xf32>, vector<1x128xf32> -> vector<1x128xf32>
    %71 = vector.broadcast %68 : vector<1x128xf32> to vector<32x128xf32>
    %72 = arith.mulf %43, %71 : vector<32x128xf32>
    %73 = vector.broadcast %70 : vector<1x128xf32> to vector<32x128xf32>
    %74 = arith.addf %72, %73 : vector<32x128xf32>
    %cst_37 = arith.constant 0.000000e+00 : f32
    %75 = vector.broadcast %cst_37 : f32 to vector<32x128xf32>
    %76 = arith.maximumf %74, %75 : vector<32x128xf32>
    %cst_38 = arith.constant 0.000000e+00 : f32
    %77 = vector.broadcast %cst_38 : f32 to vector<1x128xf32>
    %c0_39 = arith.constant 0 : index
    %c0_40 = arith.constant 0 : index
    %78 = vector.load %arg10[%c0_39, %c0_40] : memref<34x128xf32, #tpu.memory_space<vmem>>, vector<1x128xf32>
    tpu.vector_store %arg10[%c0_39, %c0_40], %77 {strides = array<i32>} : memref<34x128xf32, #tpu.memory_space<vmem>>, vector<1x128xf32>,
    %cst_41 = arith.constant 0.000000e+00 : f32
    %79 = vector.broadcast %cst_41 : f32 to vector<1x128xf32>
    %c33 = arith.constant 33 : index
    %c0_42 = arith.constant 0 : index
    %80 = vector.load %arg10[%c33, %c0_42] : memref<34x128xf32, #tpu.memory_space<vmem>>, vector<1x128xf32>
    tpu.vector_store %arg10[%c33, %c0_42], %79 {strides = array<i32>} : memref<34x128xf32, #tpu.memory_space<vmem>>, vector<1x128xf32>,
    %c1_43 = arith.constant 1 : index
    %c0_44 = arith.constant 0 : index
    %81 = vector.load %arg10[%c1_43, %c0_44] : memref<34x128xf32, #tpu.memory_space<vmem>>, vector<32x128xf32>
    tpu.vector_store %arg10[%c1_43, %c0_44], %76 {strides = array<i32>} : memref<34x128xf32, #tpu.memory_space<vmem>>, vector<32x128xf32>,
    %c0_45 = arith.constant 0 : index
    %c0_46 = arith.constant 0 : index
    %82 = vector.load %arg10[%c0_45, %c0_46] : memref<34x128xf32, #tpu.memory_space<vmem>>, vector<34x128xf32>
    %83 = vector.extract_strided_slice %82 {offsets = [1, 0], sizes = [32, 128], strides = [1, 1]} : vector<34x128xf32> to vector<32x128xf32>
    %84 = vector.extract_strided_slice %82 {offsets = [0, 0], sizes = [32, 128], strides = [1, 1]} : vector<34x128xf32> to vector<32x128xf32>
    %cst_47 = arith.constant 0.000000e+00 : f32
    %85 = vector.shape_cast %18 : vector<32x1xi1> to vector<32x1xi1>
    %86 = vector.broadcast %85 : vector<32x1xi1> to vector<32x128xi1>
    %87 = vector.broadcast %cst_47 : f32 to vector<32x128xf32>
    %88 = arith.select %86, %84, %87 : vector<32x128xi1>, vector<32x128xf32>
    %89 = vector.extract_strided_slice %82 {offsets = [2, 0], sizes = [32, 128], strides = [1, 1]} : vector<34x128xf32> to vector<32x128xf32>
    %cst_48 = arith.constant 0.000000e+00 : f32
    %90 = vector.shape_cast %20 : vector<32x1xi1> to vector<32x1xi1>
    %91 = vector.broadcast %90 : vector<32x1xi1> to vector<32x128xi1>
    %92 = vector.broadcast %cst_48 : f32 to vector<32x128xf32>
    %93 = arith.select %91, %89, %92 : vector<32x128xi1>, vector<32x128xf32>
    %c1_49 = arith.constant 1 : index
    %c0_50 = arith.constant 0 : index
    %c0_51 = arith.constant 0 : index
    %94 = vector.load %arg2[%c1_49, %c0_50, %c0_51] : memref<3x128x128xf32, #tpu.memory_space<vmem>>, vector<1x128x128xf32>
    %95 = vector.shape_cast %94 : vector<1x128x128xf32> to vector<128x128xf32>
    %cst_52 = arith.constant dense<0.000000e+00> : vector<32x128xf32>
    %96 = tpu.matmul %83, %95, %cst_52 {dimension_numbers = #tpu.dot_dimension_numbers<[1], [0], [0], [1], [0, 0, 1, 1], [], []>} : vector<32x128xf32>, vector<128x128xf32>, vector<32x128xf32> -> vector<32x128xf32>
    %c0_53 = arith.constant 0 : index
    %c0_54 = arith.constant 0 : index
    %c0_55 = arith.constant 0 : index
    %97 = vector.load %arg2[%c0_53, %c0_54, %c0_55] : memref<3x128x128xf32, #tpu.memory_space<vmem>>, vector<1x128x128xf32>
    %98 = vector.shape_cast %97 : vector<1x128x128xf32> to vector<128x128xf32>
    %cst_56 = arith.constant dense<0.000000e+00> : vector<32x128xf32>
    %99 = tpu.matmul %88, %98, %cst_56 {dimension_numbers = #tpu.dot_dimension_numbers<[1], [0], [0], [1], [0, 0, 1, 1], [], []>} : vector<32x128xf32>, vector<128x128xf32>, vector<32x128xf32> -> vector<32x128xf32>
    %100 = arith.addf %96, %99 : vector<32x128xf32>
    %c2_57 = arith.constant 2 : index
    %c0_58 = arith.constant 0 : index
    %c0_59 = arith.constant 0 : index
    %101 = vector.load %arg2[%c2_57, %c0_58, %c0_59] : memref<3x128x128xf32, #tpu.memory_space<vmem>>, vector<1x128x128xf32>
    %102 = vector.shape_cast %101 : vector<1x128x128xf32> to vector<128x128xf32>
    %cst_60 = arith.constant dense<0.000000e+00> : vector<32x128xf32>
    %103 = tpu.matmul %93, %102, %cst_60 {dimension_numbers = #tpu.dot_dimension_numbers<[1], [0], [0], [1], [0, 0, 1, 1], [], []>} : vector<32x128xf32>, vector<128x128xf32>, vector<32x128xf32> -> vector<32x128xf32>
    %104 = arith.addf %100, %103 : vector<32x128xf32>
    %cst_61 = arith.constant dense<0.000000e+00> : vector<128xf32>
    %105 = vector.multi_reduction <add>, %104, %cst_61 [0] : vector<32x128xf32> to vector<128xf32>
    %106 = vector.shape_cast %105 : vector<128xf32> to vector<1x128xf32>
    %107 = arith.mulf %104, %104 : vector<32x128xf32>
    %cst_62 = arith.constant dense<0.000000e+00> : vector<128xf32>
    %108 = vector.multi_reduction <add>, %107, %cst_62 [0] : vector<32x128xf32> to vector<128xf32>
    %109 = vector.shape_cast %108 : vector<128xf32> to vector<1x128xf32>
    %c0_63 = arith.constant 0 : index
    %c0_64 = arith.constant 0 : index
    %110 = vector.load %arg7[%c0_63, %c0_64] : memref<128x8xf32, #tpu.memory_space<vmem>>, vector<128x8xf32>
    %cst_65 = arith.constant dense<0.000000e+00> : vector<1x8xf32>
    %111 = tpu.matmul %106, %110, %cst_65 {dimension_numbers = #tpu.dot_dimension_numbers<[1], [0], [0], [1], [0, 0, 1, 1], [], []>} : vector<1x128xf32>, vector<128x8xf32>, vector<1x8xf32> -> vector<1x8xf32>
    %c0_66 = arith.constant 0 : index
    %c0_67 = arith.constant 0 : index
    %112 = vector.load %arg7[%c0_66, %c0_67] : memref<128x8xf32, #tpu.memory_space<vmem>>, vector<128x8xf32>
    %cst_68 = arith.constant dense<0.000000e+00> : vector<1x8xf32>
    %113 = tpu.matmul %109, %112, %cst_68 {dimension_numbers = #tpu.dot_dimension_numbers<[1], [0], [0], [1], [0, 0, 1, 1], [], []>} : vector<1x128xf32>, vector<128x8xf32>, vector<1x8xf32> -> vector<1x8xf32>
    %cst_69 = arith.constant 0.001953125 : f32
    %114 = vector.broadcast %cst_69 : f32 to vector<1x8xf32>
    %115 = arith.mulf %111, %114 : vector<1x8xf32>
    %cst_70 = arith.constant 0.001953125 : f32
    %116 = vector.broadcast %cst_70 : f32 to vector<1x8xf32>
    %117 = arith.mulf %113, %116 : vector<1x8xf32>
    %118 = arith.mulf %115, %115 : vector<1x8xf32>
    %119 = arith.subf %117, %118 : vector<1x8xf32>
    %c0_71 = arith.constant 0 : index
    %c0_72 = arith.constant 0 : index
    %120 = vector.load %arg5[%c0_71, %c0_72] : memref<1x8xf32, #tpu.memory_space<vmem>>, vector<1x8xf32>
    %cst_73 = arith.constant 9.99999974E-6 : f32
    %121 = vector.broadcast %cst_73 : f32 to vector<1x8xf32>
    %122 = arith.addf %119, %121 : vector<1x8xf32>
    %123 = math.rsqrt %122 : vector<1x8xf32>
    %124 = arith.mulf %120, %123 : vector<1x8xf32>
    %c0_74 = arith.constant 0 : index
    %c0_75 = arith.constant 0 : index
    %125 = vector.load %arg6[%c0_74, %c0_75] : memref<1x8xf32, #tpu.memory_space<vmem>>, vector<1x8xf32>
    %126 = arith.mulf %115, %124 : vector<1x8xf32>
    %127 = arith.subf %125, %126 : vector<1x8xf32>
    %c0_76 = arith.constant 0 : index
    %c0_77 = arith.constant 0 : index
    %128 = vector.load %arg8[%c0_76, %c0_77] : memref<8x128xf32, #tpu.memory_space<vmem>>, vector<8x128xf32>
    %cst_78 = arith.constant dense<0.000000e+00> : vector<1x128xf32>
    %129 = tpu.matmul %124, %128, %cst_78 {dimension_numbers = #tpu.dot_dimension_numbers<[1], [0], [0], [1], [0, 0, 1, 1], [], []>} : vector<1x8xf32>, vector<8x128xf32>, vector<1x128xf32> -> vector<1x128xf32>
    %c0_79 = arith.constant 0 : index
    %c0_80 = arith.constant 0 : index
    %130 = vector.load %arg8[%c0_79, %c0_80] : memref<8x128xf32, #tpu.memory_space<vmem>>, vector<8x128xf32>
    %cst_81 = arith.constant dense<0.000000e+00> : vector<1x128xf32>
    %131 = tpu.matmul %127, %130, %cst_81 {dimension_numbers = #tpu.dot_dimension_numbers<[1], [0], [0], [1], [0, 0, 1, 1], [], []>} : vector<1x8xf32>, vector<8x128xf32>, vector<1x128xf32> -> vector<1x128xf32>
    %132 = vector.broadcast %129 : vector<1x128xf32> to vector<32x128xf32>
    %133 = arith.mulf %104, %132 : vector<32x128xf32>
    %134 = vector.broadcast %131 : vector<1x128xf32> to vector<32x128xf32>
    %135 = arith.addf %133, %134 : vector<32x128xf32>
    %c0_82 = arith.constant 0 : index
    %c0_83 = arith.constant 0 : index
    %136 = vector.load %arg9[%c0_82, %c0_83] : memref<32x128xf32, #tpu.memory_space<vmem>>, vector<32x128xf32>
    tpu.vector_store %arg9[%c0_82, %c0_83], %135 {strides = array<i32>} : memref<32x128xf32, #tpu.memory_space<vmem>>, vector<32x128xf32>,
    return
  }
}

</mosaic_0001>

<llo_original>
// kernel: tile.9
$region0: #{tile.9}
  %s0 = inlined_call_operand.vmem [shape: f32[16,8,8], index: 0, kind: input, shape index: {}]
  %s1 = inlined_call_operand.vmem [shape: f32[128,8], index: 1, kind: output, shape index: {}]
  %s2 = smov 3
  %v3 = vld [vmem:[%s0] ss:$16 sm:%s2]
  %s4 = smov 12
  %v5 = vld [vmem:[%s0] ss:$16 sm:%s4]
  %vm6 = vcmask 1043458
  %v7 = vsel %vm6, %v5, %v3
  %s8 = smov 48
  %v9 = vld [vmem:[%s0] ss:$16 sm:%s8]
  %vm10 = vcmask 1045508
  %v11 = vsel %vm10, %v9, %v7
  %s12 = smov 192
  %v13 = vld [vmem:[%s0] ss:$16 sm:%s12]
  %vm14 = vcmask 1047558
  %v15 = vsel %vm14, %v13, %v11
  %vm16 = vcmask 64512
  %17 = vst.msk [vmem:[%s1] sm:$0xff] %vm16, %v15
  %s18 = scalar_lea.vmem %s0, 15
  %s19 = smov 3
  %v20 = vld [vmem:[%s18] ss:$16 sm:%s19]
  %s21 = scalar_lea.vmem %s0, 15
  %s22 = smov 12
  %v23 = vld [vmem:[%s21] ss:$16 sm:%s22]
  %vm24 = vcmask 1043458
  %v25 = vsel %vm24, %v23, %v20
  %s26 = scalar_lea.vmem %s0, 15
  %s27 = smov 48
  %v28 = vld [vmem:[%s26] ss:$16 sm:%s27]
  %vm29 = vcmask 1045508
  %v30 = vsel %vm29, %v28, %v25
  %s31 = scalar_lea.vmem %s0, 15
  %s32 = smov 192
  %v33 = vld [vmem:[%s31] ss:$16 sm:%s32]
  %vm34 = vcmask 1047558
  %v35 = vsel %vm34, %v33, %v30
  %36 = vrot.lane.b32.xlu0 %v35, 120
  %v37 = vpop.permute.xlu0 %36
  %vm38 = vcmask 1048512
  %39 = vst.msk [vmem:[%s1] sm:$0xff] %vm38, %v37
  %s40 = scalar_lea.vmem %s0, 14
  %s41 = smov 3
  %v42 = vld [vmem:[%s40] ss:$16 sm:%s41]
  %s43 = scalar_lea.vmem %s0, 14
  %s44 = smov 12
  %v45 = vld [vmem:[%s43] ss:$16 sm:%s44]
  %vm46 = vcmask 1043458
  %v47 = vsel %vm46, %v45, %v42
  %s48 = scalar_lea.vmem %s0, 14
  %s49 = smov 48
  %v50 = vld [vmem:[%s48] ss:$16 sm:%s49]
  %vm51 = vcmask 1045508
  %v52 = vsel %vm51, %v50, %v47
  %s53 = scalar_lea.vmem %s0, 14
  %s54 = smov 192
  %v55 = vld [vmem:[%s53] ss:$16 sm:%s54]
  %vm56 = vcmask 1047558
  %v57 = vsel %vm56, %v55, %v52
  %58 = vrot.lane.b32.xlu0 %v57, 112
  %v59 = vpop.permute.xlu0 %58
  %vm60 = vcmask 982912
  %61 = vst.msk [vmem:[%s1] sm:$0xff] %vm60, %v59
  %s62 = scalar_lea.vmem %s0, 13
  %s63 = smov 3
  %v64 = vld [vmem:[%s62] ss:$16 sm:%s63]
  %s65 = scalar_lea.vmem %s0, 13
  %s66 = smov 12
  %v67 = vld [vmem:[%s65] ss:$16 sm:%s66]
  %vm68 = vcmask 1043458
  %v69 = vsel %vm68, %v67, %v64
  %s70 = scalar_lea.vmem %s0, 13
  %s71 = smov 48
  %v72 = vld [vmem:[%s70] ss:$16 sm:%s71]
  %vm73 = vcmask 1045508
  %v74 = vsel %vm73, %v72, %v69
  %s75 = scalar_lea.vmem %s0, 13
  %s76 = smov 192
  %v77 = vld [vmem:[%s75] ss:$16 sm:%s76]
  %vm78 = vcmask 1047558
  %v79 = vsel %vm78, %v77, %v74
  %80 = vrot.lane.b32.xlu0 %v79, 104
  %v81 = vpop.permute.xlu0 %80
  %vm82 = vcmask 917312
  %83 = vst.msk [vmem:[%s1] sm:$0xff] %vm82, %v81
  %s84 = scalar_lea.vmem %s0, 12
  %s85 = smov 3
  %v86 = vld [vmem:[%s84] ss:$16 sm:%s85]
  %s87 = scalar_lea.vmem %s0, 12
  %s88 = smov 12
  %v89 = vld [vmem:[%s87] ss:$16 sm:%s88]
  %vm90 = vcmask 1043458
  %v91 = vsel %vm90, %v89, %v86
  %s92 = scalar_lea.vmem %s0, 12
  %s93 = smov 48
  %v94 = vld [vmem:[%s92] ss:$16 sm:%s93]
  %vm95 = vcmask 1045508
  %v96 = vsel %vm95, %v94, %v91
  %s97 = scalar_lea.vmem %s0, 12
  %s98 = smov 192
  %v99 = vld [vmem:[%s97] ss:$16 sm:%s98]
  %vm100 = vcmask 1047558
  %v101 = vsel %vm100, %v99, %v96
  %102 = vrot.lane.b32.xlu0 %v101, 96
  %v103 = vpop.permute.xlu0 %102
  %vm104 = vcmask 851712
  %105 = vst.msk [vmem:[%s1] sm:$0xff] %vm104, %v103
  %s106 = scalar_lea.vmem %s0, 11
  %s107 = smov 3
  %v108 = vld [vmem:[%s106] ss:$16 sm:%s107]
  %s109 = scalar_lea.vmem %s0, 11
  %s110 = smov 12
  %v111 = vld [vmem:[%s109] ss:$16 sm:%s110]
  %vm112 = vcmask 1043458
  %v113 = vsel %vm112, %v111, %v108
  %s114 = scalar_lea.vmem %s0, 11
  %s115 = smov 48
  %v116 = vld [vmem:[%s114] ss:$16 sm:%s115]
  %vm117 = vcmask 1045508
  %v118 = vsel %vm117, %v116, %v113
  %s119 = scalar_lea.vmem %s0, 11
  %s120 = smov 192
  %v121 = vld [vmem:[%s119] ss:$16 sm:%s120]
  %vm122 = vcmask 1047558
  %v123 = vsel %vm122, %v121, %v118
  %124 = vrot.lane.b32.xlu0 %v123, 88
  %v125 = vpop.permute.xlu0 %124
  %vm126 = vcmask 786112
  %127 = vst.msk [vmem:[%s1] sm:$0xff] %vm126, %v125
  %s128 = scalar_lea.vmem %s0, 10
  %s129 = smov 3
  %v130 = vld [vmem:[%s128] ss:$16 sm:%s129]
  %s131 = scalar_lea.vmem %s0, 10
  %s132 = smov 12
  %v133 = vld [vmem:[%s131] ss:$16 sm:%s132]
  %vm134 = vcmask 1043458
  %v135 = vsel %vm134, %v133, %v130
  %s136 = scalar_lea.vmem %s0, 10
  %s137 = smov 48
  %v138 = vld [vmem:[%s136] ss:$16 sm:%s137]
  %vm139 = vcmask 1045508
  %v140 = vsel %vm139, %v138, %v135
  %s141 = scalar_lea.vmem %s0, 10
  %s142 = smov 192
  %v143 = vld [vmem:[%s141] ss:$16 sm:%s142]
  %vm144 = vcmask 1047558
  %v145 = vsel %vm144, %v143, %v140
  %146 = vrot.lane.b32.xlu0 %v145, 80
  %v147 = vpop.permute.xlu0 %146
  %vm148 = vcmask 720512
  %149 = vst.msk [vmem:[%s1] sm:$0xff] %vm148, %v147
  %s150 = scalar_lea.vmem %s0, 9
  %s151 = smov 3
  %v152 = vld [vmem:[%s150] ss:$16 sm:%s151]
  %s153 = scalar_lea.vmem %s0, 9
  %s154 = smov 12
  %v155 = vld [vmem:[%s153] ss:$16 sm:%s154]
  %vm156 = vcmask 1043458
  %v157 = vsel %vm156, %v155, %v152
  %s158 = scalar_lea.vmem %s0, 9
  %s159 = smov 48
  %v160 = vld [vmem:[%s158] ss:$16 sm:%s159]
  %vm161 = vcmask 1045508
  %v162 = vsel %vm161, %v160, %v157
  %s163 = scalar_lea.vmem %s0, 9
  %s164 = smov 192
  %v165 = vld [vmem:[%s163] ss:$16 sm:%s164]
  %vm166 = vcmask 1047558
  %v167 = vsel %vm166, %v165, %v162
  %168 = vrot.lane.b32.xlu0 %v167, 72
  %v169 = vpop.permute.xlu0 %168
  %vm170 = vcmask 654912
  %171 = vst.msk [vmem:[%s1] sm:$0xff] %vm170, %v169
  %s172 = scalar_lea.vmem %s0, 8
  %s173 = smov 3
  %v174 = vld [vmem:[%s172] ss:$16 sm:%s173]
  %s175 = scalar_lea.vmem %s0, 8
  %s176 = smov 12
  %v177 = vld [vmem:[%s175] ss:$16 sm:%s176]
  %vm178 = vcmask 1043458
  %v179 = vsel %vm178, %v177, %v174
  %s180 = scalar_lea.vmem %s0, 8
  %s181 = smov 48
  %v182 = vld [vmem:[%s180] ss:$16 sm:%s181]
  %vm183 = vcmask 1045508
  %v184 = vsel %vm183, %v182, %v179
  %s185 = scalar_lea.vmem %s0, 8
  %s186 = smov 192
  %v187 = vld [vmem:[%s185] ss:$16 sm:%s186]
  %vm188 = vcmask 1047558
  %v189 = vsel %vm188, %v187, %v184
  %190 = vrot.lane.b32.xlu0 %v189, 64
  %v191 = vpop.permute.xlu0 %190
  %vm192 = vcmask 589312
  %193 = vst.msk [vmem:[%s1] sm:$0xff] %vm192, %v191
  %s194 = scalar_lea.vmem %s0, 7
  %s195 = smov 3
  %v196 = vld [vmem:[%s194] ss:$16 sm:%s195]
  %s197 = scalar_lea.vmem %s0, 7
  %s198 = smov 12
  %v199 = vld [vmem:[%s197] ss:$16 sm:%s198]
  %vm200 = vcmask 1043458
  %v201 = vsel %vm200, %v199, %v196
  %s202 = scalar_lea.vmem %s0, 7
  %s203 = smov 48
  %v204 = vld [vmem:[%s202] ss:$16 sm:%s203]
  %vm205 = vcmask 1045508
  %v206 = vsel %vm205, %v204, %v201
  %s207 = scalar_lea.vmem %s0, 7
  %s208 = smov 192
  %v209 = vld [vmem:[%s207] ss:$16 sm:%s208]
  %vm210 = vcmask 1047558
  %v211 = vsel %vm210, %v209, %v206
  %212 = vrot.lane.b32.xlu0 %v211, 56
  %v213 = vpop.permute.xlu0 %212
  %vm214 = vcmask 523712
  %215 = vst.msk [vmem:[%s1] sm:$0xff] %vm214, %v213
  %s216 = scalar_lea.vmem %s0, 6
  %s217 = smov 3
  %v218 = vld [vmem:[%s216] ss:$16 sm:%s217]
  %s219 = scalar_lea.vmem %s0, 6
  %s220 = smov 12
  %v221 = vld [vmem:[%s219] ss:$16 sm:%s220]
  %vm222 = vcmask 1043458
  %v223 = vsel %vm222, %v221, %v218
  %s224 = scalar_lea.vmem %s0, 6
  %s225 = smov 48
  %v226 = vld [vmem:[%s224] ss:$16 sm:%s225]
  %vm227 = vcmask 1045508
  %v228 = vsel %vm227, %v226, %v223
  %s229 = scalar_lea.vmem %s0, 6
  %s230 = smov 192
  %v231 = vld [vmem:[%s229] ss:$16 sm:%s230]
  %vm232 = vcmask 1047558
  %v233 = vsel %vm232, %v231, %v228
  %234 = vrot.lane.b32.xlu0 %v233, 48
  %v235 = vpop.permute.xlu0 %234
  %vm236 = vcmask 458112
  %237 = vst.msk [vmem:[%s1] sm:$0xff] %vm236, %v235
  %s238 = scalar_lea.vmem %s0, 5
  %s239 = smov 3
  %v240 = vld [vmem:[%s238] ss:$16 sm:%s239]
  %s241 = scalar_lea.vmem %s0, 5
  %s242 = smov 12
  %v243 = vld [vmem:[%s241] ss:$16 sm:%s242]
  %vm244 = vcmask 1043458
  %v245 = vsel %vm244, %v243, %v240
  %s246 = scalar_lea.vmem %s0, 5
  %s247 = smov 48
  %v248 = vld [vmem:[%s246] ss:$16 sm:%s247]
  %vm249 = vcmask 1045508
  %v250 = vsel %vm249, %v248, %v245
  %s251 = scalar_lea.vmem %s0, 5
  %s252 = smov 192
  %v253 = vld [vmem:[%s251] ss:$16 sm:%s252]
  %vm254 = vcmask 1047558
  %v255 = vsel %vm254, %v253, %v250
  %256 = vrot.lane.b32.xlu0 %v255, 40
  %v257 = vpop.permute.xlu0 %256
  %vm258 = vcmask 392512
  %259 = vst.msk [vmem:[%s1] sm:$0xff] %vm258, %v257
  %s260 = scalar_lea.vmem %s0, 4
  %s261 = smov 3
  %v262 = vld [vmem:[%s260] ss:$16 sm:%s261]
  %s263 = scalar_lea.vmem %s0, 4
  %s264 = smov 12
  %v265 = vld [vmem:[%s263] ss:$16 sm:%s264]
  %vm266 = vcmask 1043458
  %v267 = vsel %vm266, %v265, %v262
  %s268 = scalar_lea.vmem %s0, 4
  %s269 = smov 48
  %v270 = vld [vmem:[%s268] ss:$16 sm:%s269]
  %vm271 = vcmask 1045508
  %v272 = vsel %vm271, %v270, %v267
  %s273 = scalar_lea.vmem %s0, 4
  %s274 = smov 192
  %v275 = vld [vmem:[%s273] ss:$16 sm:%s274]
  %vm276 = vcmask 1047558
  %v277 = vsel %vm276, %v275, %v272
  %278 = vrot.lane.b32.xlu0 %v277, 32
  %v279 = vpop.permute.xlu0 %278
  %vm280 = vcmask 326912
  %281 = vst.msk [vmem:[%s1] sm:$0xff] %vm280, %v279
  %s282 = scalar_lea.vmem %s0, 3
  %s283 = smov 3
  %v284 = vld [vmem:[%s282] ss:$16 sm:%s283]
  %s285 = scalar_lea.vmem %s0, 3
  %s286 = smov 12
  %v287 = vld [vmem:[%s285] ss:$16 sm:%s286]
  %vm288 = vcmask 1043458
  %v289 = vsel %vm288, %v287, %v284
  %s290 = scalar_lea.vmem %s0, 3
  %s291 = smov 48
  %v292 = vld [vmem:[%s290] ss:$16 sm:%s291]
  %vm293 = vcmask 1045508
  %v294 = vsel %vm293, %v292, %v289
  %s295 = scalar_lea.vmem %s0, 3
  %s296 = smov 192
  %v297 = vld [vmem:[%s295] ss:$16 sm:%s296]
  %vm298 = vcmask 1047558
  %v299 = vsel %vm298, %v297, %v294
  %300 = vrot.lane.b32.xlu0 %v299, 24
  %v301 = vpop.permute.xlu0 %300
  %vm302 = vcmask 261312
  %303 = vst.msk [vmem:[%s1] sm:$0xff] %vm302, %v301
  %s304 = scalar_lea.vmem %s0, 2
  %s305 = smov 3
  %v306 = vld [vmem:[%s304] ss:$16 sm:%s305]
  %s307 = scalar_lea.vmem %s0, 2
  %s308 = smov 12
  %v309 = vld [vmem:[%s307] ss:$16 sm:%s308]
  %vm310 = vcmask 1043458
  %v311 = vsel %vm310, %v309, %v306
  %s312 = scalar_lea.vmem %s0, 2
  %s313 = smov 48
  %v314 = vld [vmem:[%s312] ss:$16 sm:%s313]
  %vm315 = vcmask 1045508
  %v316 = vsel %vm315, %v314, %v311
  %s317 = scalar_lea.vmem %s0, 2
  %s318 = smov 192
  %v319 = vld [vmem:[%s317] ss:$16 sm:%s318]
  %vm320 = vcmask 1047558
  %v321 = vsel %vm320, %v319, %v316
  %322 = vrot.lane.b32.xlu0 %v321, 16
  %v323 = vpop.permute.xlu0 %322
  %vm324 = vcmask 195712
  %325 = vst.msk [vmem:[%s1] sm:$0xff] %vm324, %v323
  %s326 = scalar_lea.vmem %s0, 1
  %s327 = smov 3
  %v328 = vld [vmem:[%s326] ss:$16 sm:%s327]
  %s329 = scalar_lea.vmem %s0, 1
  %s330 = smov 12
  %v331 = vld [vmem:[%s329] ss:$16 sm:%s330]
  %vm332 = vcmask 1043458
  %v333 = vsel %vm332, %v331, %v328
  %s334 = scalar_lea.vmem %s0, 1
  %s335 = smov 48
  %v336 = vld [vmem:[%s334] ss:$16 sm:%s335]
  %vm337 = vcmask 1045508
  %v338 = vsel %vm337, %v336, %v333
  %s339 = scalar_lea.vmem %s0, 1
  %s340 = smov 192
  %v341 = vld [vmem:[%s339] ss:$16 sm:%s340]
  %vm342 = vcmask 1047558
  %v343 = vsel %vm342, %v341, %v338
  %344 = vrot.lane.b32.xlu0 %v343, 8
  %v345 = vpop.permute.xlu0 %344
  %vm346 = vcmask 130112
  %347 = vst.msk [vmem:[%s1] sm:$0xff] %vm346, %v345

// kernel: basic_block_pallas.1
$region0: #{basic_block_pallas.1}
  #allocation0 [shape = 'u32[]', space=smem, size = 0x4, offset = 0x4, fixed_abs, tag = 'smem constant byte address 0x4 - core index']
  #allocation1 [shape = 'u32[144,128]{1,0:T(1,128)}', space=vmem, size = 0x12000, scoped, tag = 'internal scratch']
  #allocation2 [shape = 'f32[34,128]{1,0:T(8,128)}', space=vmem, size = 0x5000, scoped, tag = 'scratch operand']
  %s0 = inlined_call_operand.vmem [shape: f32[34,64], index: 0, kind: input, shape index: {}]
  %s1 = inlined_call_operand.vmem [shape: f32[3,64,128], index: 1, kind: input, shape index: {}]
  %s2 = inlined_call_operand.vmem [shape: f32[3,128,128], index: 2, kind: input, shape index: {}]
  %s3 = inlined_call_operand.vmem [shape: f32[1,8], index: 3, kind: input, shape index: {}]
  %s4 = inlined_call_operand.vmem [shape: f32[1,8], index: 4, kind: input, shape index: {}]
  %s5 = inlined_call_operand.vmem [shape: f32[1,8], index: 5, kind: input, shape index: {}]
  %s6 = inlined_call_operand.vmem [shape: f32[1,8], index: 6, kind: input, shape index: {}]
  %s7 = inlined_call_operand.vmem [shape: f32[128,8], index: 7, kind: input, shape index: {}]
  %s8 = inlined_call_operand.vmem [shape: f32[8,128], index: 8, kind: input, shape index: {}]
  %s9 = inlined_call_operand.vmem [shape: f32[32,128], index: 9, kind: output, shape index: {}]
  %s10 = sld [smem:[#allocation0]]
  $region46: #{basic_block_pallas.1} parent=0
    _
  %s12 = ssub.s32 1, %s10
  %s13 = scalar_select 0, %s12, %s10
  // Predicated region
  $region2: #{basic_block_pallas.1} parent=0 // pred_check
    _
  $region3: #{basic_block_pallas.1} parent=0 // pred_check_branch
    %15 = sbr.rel (0) target = $region5
  $region4: #{basic_block_pallas.1} parent=0 // pred_region
    _
  $region5: #{basic_block_pallas.1} parent=0 // pred_fallthru
    _
  // Predicated region
  $region6: #{basic_block_pallas.1} parent=0 // pred_check
    _
  $region7: #{basic_block_pallas.1} parent=0 // pred_check_branch
    %17 = sbr.rel (0) target = $region9
  $region8: #{basic_block_pallas.1} parent=0 // pred_region
    _
  $region9: #{basic_block_pallas.1} parent=0 // pred_fallthru
    _
  // Predicated region
  $region10: #{basic_block_pallas.1} parent=0 // pred_check
    _
  $region11: #{basic_block_pallas.1} parent=0 // pred_check_branch
    %19 = sbr.rel (0) target = $region13
  $region12: #{basic_block_pallas.1} parent=0 // pred_region
    _
  $region13: #{basic_block_pallas.1} parent=0 // pred_fallthru
    _
  // Predicated region
  $region14: #{basic_block_pallas.1} parent=0 // pred_check
    _
  $region15: #{basic_block_pallas.1} parent=0 // pred_check_branch
    %21 = sbr.rel (0) target = $region17
  $region16: #{basic_block_pallas.1} parent=0 // pred_region
    _
  $region17: #{basic_block_pallas.1} parent=0 // pred_fallthru
    _
  // Predicated region
  $region18: #{basic_block_pallas.1} parent=0 // pred_check
    _
  $region19: #{basic_block_pallas.1} parent=0 // pred_check_branch
    %23 = sbr.rel (0) target = $region21
  $region20: #{basic_block_pallas.1} parent=0 // pred_region
    _
  $region21: #{basic_block_pallas.1} parent=0 // pred_fallthru
    _
  // Predicated region
  $region22: #{basic_block_pallas.1} parent=0 // pred_check
    _
  $region23: #{basic_block_pallas.1} parent=0 // pred_check_branch
    %25 = sbr.rel (0) target = $region25
  $region24: #{basic_block_pallas.1} parent=0 // pred_region
    _
  $region25: #{basic_block_pallas.1} parent=0 // pred_fallthru
    _
  // Predicated region
  $region26: #{basic_block_pallas.1} parent=0 // pred_check
    _
  $region27: #{basic_block_pallas.1} parent=0 // pred_check_branch
    %27 = sbr.rel (0) target = $region29
  $region28: #{basic_block_pallas.1} parent=0 // pred_region
    _
  $region29: #{basic_block_pallas.1} parent=0 // pred_fallthru
    _
  // Predicated region
  $region30: #{basic_block_pallas.1} parent=0 // pred_check
    _
  $region31: #{basic_block_pallas.1} parent=0 // pred_check_branch
    %29 = sbr.rel (0) target = $region33
  $region32: #{basic_block_pallas.1} parent=0 // pred_region
    _
  $region33: #{basic_block_pallas.1} parent=0 // pred_fallthru
    _
  // Predicated region
  $region34: #{basic_block_pallas.1} parent=0 // pred_check
    _
  $region35: #{basic_block_pallas.1} parent=0 // pred_check_branch
    %31 = sbr.rel (0) target = $region37
  $region36: #{basic_block_pallas.1} parent=0 // pred_region
    _
  $region37: #{basic_block_pallas.1} parent=0 // pred_fallthru
    _
  %v32 = vlaneseq
  %v33 = vshrl.u32 %v32, 7
  %v34 = vadd.s32 %v33, 8
  %v35 = vadd.s32 %v33, 16
  %v36 = vadd.s32 %v33, 24
  %vm37 = vcmp.lt.s32.totalorder %v33, 0
  %v38 = vsub.s32 0, %v33
  %v39 = vsel %vm37, %v38, %v33
  %v40 = vshrl.u32 %v39, 4
  %v41 = vand.u32 %v39, 15
  %v42 = vsub.s32 0, %v41
  %v43 = vsel %vm37, %v42, %v41
  %vm44 = vcmp.lt.s32.totalorder %v34, 0
  %v45 = vsub.s32 0, %v34
  %v46 = vsel %vm44, %v45, %v34
  %v47 = vshrl.u32 %v46, 4
  %v48 = vand.u32 %v46, 15
  %v49 = vsub.s32 0, %v48
  %v50 = vsel %vm44, %v49, %v48
  %vm51 = vcmp.lt.s32.totalorder %v35, 0
  %v52 = vsub.s32 0, %v35
  %v53 = vsel %vm51, %v52, %v35
  %v54 = vshrl.u32 %v53, 4
  %v55 = vand.u32 %v53, 15
  %v56 = vsub.s32 0, %v55
  %v57 = vsel %vm51, %v56, %v55
  %vm58 = vcmp.lt.s32.totalorder %v36, 0
  %v59 = vsub.s32 0, %v36
  %v60 = vsel %vm58, %v59, %v36
  %v61 = vshrl.u32 %v60, 4
  %v62 = vand.u32 %v60, 15
  %v63 = vsub.s32 0, %v62
  %v64 = vsel %vm58, %v63, %v62
  %vm65 = vcmp.ne.s32.totalorder %v43, 0
  %vm66 = vcmp.ne.s32.totalorder %v50, 0
  %vm67 = vcmp.ne.s32.totalorder %v57, 0
  %vm68 = vcmp.ne.s32.totalorder %v64, 0
  %vm69 = vcmp.lt.s32.totalorder %v43, 0
  %vm70 = vcmp.lt.s32.totalorder %v50, 0
  %vm71 = vcmp.lt.s32.totalorder %v57, 0
  %vm72 = vcmp.lt.s32.totalorder %v64, 0
  %vm73 = vmand %vm69, %vm65
  %vm74 = vmand %vm70, %vm66
  %vm75 = vmand %vm71, %vm67
  %vm76 = vmand %vm72, %vm68
  %v77 = vadd.s32 %v43, 16
  %v78 = vadd.s32 %v50, 16
  %v79 = vadd.s32 %v57, 16
  %v80 = vadd.s32 %v64, 16
  %v81 = vsel %vm73, %v77, %v43
  %v82 = vsel %vm74, %v78, %v50
  %v83 = vsel %vm75, %v79, %v57
  %v84 = vsel %vm76, %v80, %v64
  %vm85 = vcmp.ne.s32.totalorder %v81, 0
  %vm86 = vcmp.ne.s32.totalorder %v82, 0
  %vm87 = vcmp.ne.s32.totalorder %v83, 0
  %vm88 = vcmp.ne.s32.totalorder %v84, 0
  %vm89 = vcmp.ne.s32.totalorder %v81, 15
  %vm90 = vcmp.ne.s32.totalorder %v82, 15
  %vm91 = vcmp.ne.s32.totalorder %v83, 15
  %vm92 = vcmp.ne.s32.totalorder %v84, 15
  %v93 = vld [vmem:[%s0] sm:$0xff]
  %v94 = vld [vmem:[%s0 + $0x8] sm:$0xff]
  %v95 = vld [vmem:[%s0 + $0x10] sm:$0xff]
  %v96 = vld [vmem:[%s0 + $0x18] sm:$0xff]
  %v97 = vld [vmem:[%s0 + $0x20] sm:$0x3]
  %v98 = vsel %vm85, 1, 0
  %v99 = vsel %vm86, 1, 0
  %v100 = vsel %vm87, 1, 0
  %v101 = vsel %vm88, 1, 0
  %vm102 = vcmp.eq.s32.totalorder %v98, 1
  %vm103 = vcmp.eq.s32.totalorder %v99, 1
  %vm104 = vcmp.eq.s32.totalorder %v100, 1
  %vm105 = vcmp.eq.s32.totalorder %v101, 1
  %v106 = vsel %vm102, %v93, 0.0
  %v107 = vsel %vm103, %v94, 0.0
  %v108 = vsel %vm104, %v95, 0.0
  %v109 = vsel %vm105, %v96, 0.0
  %v110 = vsel %vm89, 1, 0
  %v111 = vsel %vm90, 1, 0
  %v112 = vsel %vm91, 1, 0
  %v113 = vsel %vm92, 1, 0
  %vm114 = vcmp.eq.s32.totalorder %v110, 1
  %vm115 = vcmp.eq.s32.totalorder %v111, 1
  %vm116 = vcmp.eq.s32.totalorder %v112, 1
  %vm117 = vcmp.eq.s32.totalorder %v113, 1
  %vm123 = vcmask 1045504
  %v124 = vrot.slane %v93, 2
  %v125 = vrot.slane %v94, 2
  %v126 = vsel %vm123, %v124, %v125
  %v127 = vrot.slane %v95, 2
  %v128 = vsel %vm123, %v125, %v127
  %v129 = vrot.slane %v96, 2
  %v130 = vsel %vm123, %v127, %v129
  %v131 = vrot.slane %v97, 2
  %v132 = vsel %vm123, %v129, %v131
  %v137 = vsel %vm114, %v126, 0.0
  %v138 = vsel %vm115, %v128, 0.0
  %v139 = vsel %vm116, %v130, 0.0
  %v140 = vsel %vm117, %v132, 0.0
  %s141 = scalar_lea.vmem %s1, 64
  %v142 = vld [vmem:[%s141] sm:$0xff]
  %v143 = vld [vmem:[%s141 + $0x8] sm:$0xff]
  %v144 = vld [vmem:[%s141 + $0x10] sm:$0xff]
  %v145 = vld [vmem:[%s141 + $0x18] sm:$0xff]
  %v146 = vld [vmem:[%s141 + $0x20] sm:$0xff]
  %v147 = vld [vmem:[%s141 + $0x28] sm:$0xff]
  %v148 = vld [vmem:[%s141 + $0x30] sm:$0xff]
  %v149 = vld [vmem:[%s141 + $0x38] sm:$0xff]
  %v150 = vld [vmem:[%s1] sm:$0xff]
  %v151 = vld [vmem:[%s1 + $0x8] sm:$0xff]
  %v152 = vld [vmem:[%s1 + $0x10] sm:$0xff]
  %v153 = vld [vmem:[%s1 + $0x18] sm:$0xff]
  %v154 = vld [vmem:[%s1 + $0x20] sm:$0xff]
  %v155 = vld [vmem:[%s1 + $0x28] sm:$0xff]
  %v156 = vld [vmem:[%s1 + $0x30] sm:$0xff]
  %v157 = vld [vmem:[%s1 + $0x38] sm:$0xff]
  %vm158 = vcmask 523264
  %v160 = vsel %vm158, %v106, 0
  %v163 = vsel %vm158, %v107, 0
  %v166 = vsel %vm158, %v108, 0
  %v169 = vsel %vm158, %v109, 0
  %171 = vmatprep.subr.mxu0 0.0
  %172 = vmatpush1.msra.mxu0 %v150
  %173 = vmatprep.subr.mxu0 0.0
  %174 = vmatpush1.msra.mxu0 %v151
  %175 = vmatprep.subr.mxu0 0.0
  %176 = vmatpush1.msra.mxu0 %v152
  %177 = vmatprep.subr.mxu0 0.0
  %178 = vmatpush1.msra.mxu0 %v153
  %179 = vmatprep.subr.mxu0 0.0
  %180 = vmatpush1.msra.mxu0 %v154
  %181 = vmatprep.subr.mxu0 0.0
  %182 = vmatpush1.msra.mxu0 %v155
  %183 = vmatprep.subr.mxu0 0.0
  %184 = vmatpush1.msra.mxu0 %v156
  %185 = vmatprep.subr.mxu0 0.0
  %186 = vmatpush1.msra.mxu0 %v157
  %187 = vmatprep.subr.mxu0 0.0
  %188 = vmatpush1.msra.mxu0 0.0
  %189 = vmatprep.subr.mxu0 0.0
  %190 = vmatpush1.msra.mxu0 0.0
  %191 = vmatprep.subr.mxu0 0.0
  %192 = vmatpush1.msra.mxu0 0.0
  %193 = vmatprep.subr.mxu0 0.0
  %194 = vmatpush1.msra.mxu0 0.0
  %195 = vmatprep.subr.mxu0 0.0
  %196 = vmatpush1.msra.mxu0 0.0
  %197 = vmatprep.subr.mxu0 0.0
  %198 = vmatpush1.msra.mxu0 0.0
  %199 = vmatprep.subr.mxu0 0.0
  %200 = vmatpush1.msra.mxu0 0.0
  %201 = vmatprep.subr.mxu0 0.0
  %202 = vmatpush1.msra.mxu0 0.0
  %203 = vmatprep.subr.mxu0 0.0
  %204 = vmatpush1.msra.mxu0 0.0
  %205 = vmatprep.subr.mxu0 0.0
  %206 = vmatpush1.msra.mxu0 0.0
  %207 = vmatprep.subr.mxu0 0.0
  %208 = vmatpush1.msra.mxu0 0.0
  %209 = vmatprep.subr.mxu0 0.0
  %210 = vmatpush1.msra.mxu0 0.0
  %211 = vmatprep.subr.mxu0 0.0
  %212 = vmatpush1.msra.mxu0 0.0
  %213 = vmatprep.subr.mxu0 0.0
  %214 = vmatpush1.msra.mxu0 0.0
  %215 = vmatprep.subr.mxu0 0.0
  %216 = vmatpush1.msra.mxu0 0.0
  %217 = vmatprep.subr.mxu0 0.0
  %218 = vmatpush1.msra.mxu0 0.0
  %219 = vmatprep.subr.mxu0 0.0
  %220 = vmatpush1.msra.mxu0 0.0
  %221 = vmatprep.subr.mxu0 0.0
  %222 = vmatpush1.msra.mxu0 0.0
  %223 = vmatprep.subr.mxu0 0.0
  %224 = vmatpush1.msra.mxu0 0.0
  %225 = vmatprep.subr.mxu0 0.0
  %226 = vmatpush1.msra.mxu0 0.0
  %227 = vmatprep.subr.mxu0 0.0
  %228 = vmatpush1.msra.mxu0 0.0
  %229 = vmatprep.subr.mxu0 0.0
  %230 = vmatpush1.msra.mxu0 0.0
  %231 = vmatprep.subr.mxu0 0.0
  %232 = vmatpush1.msra.mxu0 0.0
  %233 = vmatprep.subr.mxu0 0.0
  %234 = vmatpush1.msra.mxu0 0.0
  %235 = vmatprep.mubr.f32.mxu0 0.0
  %236 = vmatmul.mubr.f32.gmra.mrb[0].mxu0 %v160
  %v237 = vpop.f32.mrb[0].mxu0
  %v238 = vadd.f32 0.0, %v237
  %v239 = vpop.f32.mrb[0].mxu0
  %240 = vmatprep.mubr.f32.mxu0 0.0
  %241 = vmatmul.mubr.f32.gmra.mrb[0].mxu0 %v163
  %v242 = vpop.f32.mrb[0].mxu0
  %v243 = vadd.f32 0.0, %v242
  %v244 = vpop.f32.mrb[0].mxu0
  %245 = vmatprep.mubr.f32.mxu0 0.0
  %246 = vmatmul.mubr.f32.gmra.mrb[0].mxu0 %v166
  %v247 = vpop.f32.mrb[0].mxu0
  %v248 = vadd.f32 0.0, %v247
  %v249 = vpop.f32.mrb[0].mxu0
  %250 = vmatprep.mubr.f32.mxu0 0.0
  %251 = vmatmul.mubr.f32.gmra.mrb[0].mxu0 %v169
  %v252 = vpop.f32.mrb[0].mxu0
  %v253 = vadd.f32 0.0, %v252
  %v254 = vpop.f32.mrb[0].mxu0
  %255 = vdwg.mxu0
  %vm256 = vcmask 1046528
  %v257 = vrot.slane %v93, 1
  %v258 = vrot.slane %v94, 1
  %v259 = vsel %vm256, %v257, %v258
  %v260 = vrot.slane %v95, 1
  %v261 = vsel %vm256, %v258, %v260
  %v262 = vrot.slane %v96, 1
  %v263 = vsel %vm256, %v260, %v262
  %v264 = vrot.slane %v97, 1
  %v265 = vsel %vm256, %v262, %v264
  %v266 = vsel %vm158, %v259, 0
  %v268 = vsel %vm158, %v261, 0
  %v270 = vsel %vm158, %v263, 0
  %v272 = vsel %vm158, %v265, 0
  %274 = vmatprep.subr.mxu0 0.0
  %275 = vmatpush1.msra.mxu0 %v142
  %276 = vmatprep.subr.mxu0 0.0
  %277 = vmatpush1.msra.mxu0 %v143
  %278 = vmatprep.subr.mxu0 0.0
  %279 = vmatpush1.msra.mxu0 %v144
  %280 = vmatprep.subr.mxu0 0.0
  %281 = vmatpush1.msra.mxu0 %v145
  %282 = vmatprep.subr.mxu0 0.0
  %283 = vmatpush1.msra.mxu0 %v146
  %284 = vmatprep.subr.mxu0 0.0
  %285 = vmatpush1.msra.mxu0 %v147
  %286 = vmatprep.subr.mxu0 0.0
  %287 = vmatpush1.msra.mxu0 %v148
  %288 = vmatprep.subr.mxu0 0.0
  %289 = vmatpush1.msra.mxu0 %v149
  %290 = vmatprep.subr.mxu0 0.0
  %291 = vmatpush1.msra.mxu0 0.0
  %292 = vmatprep.subr.mxu0 0.0
  %293 = vmatpush1.msra.mxu0 0.0
  %294 = vmatprep.subr.mxu0 0.0
  %295 = vmatpush1.msra.mxu0 0.0
  %296 = vmatprep.subr.mxu0 0.0
  %297 = vmatpush1.msra.mxu0 0.0
  %298 = vmatprep.subr.mxu0 0.0
  %299 = vmatpush1.msra.mxu0 0.0
  %300 = vmatprep.subr.mxu0 0.0
  %301 = vmatpush1.msra.mxu0 0.0
  %302 = vmatprep.subr.mxu0 0.0
  %303 = vmatpush1.msra.mxu0 0.0
  %304 = vmatprep.subr.mxu0 0.0
  %305 = vmatpush1.msra.mxu0 0.0
  %306 = vmatprep.subr.mxu0 0.0
  %307 = vmatpush1.msra.mxu0 0.0
  %308 = vmatprep.subr.mxu0 0.0
  %309 = vmatpush1.msra.mxu0 0.0
  %310 = vmatprep.subr.mxu0 0.0
  %311 = vmatpush1.msra.mxu0 0.0
  %312 = vmatprep.subr.mxu0 0.0
  %313 = vmatpush1.msra.mxu0 0.0
  %314 = vmatprep.subr.mxu0 0.0
  %315 = vmatpush1.msra.mxu0 0.0
  %316 = vmatprep.subr.mxu0 0.0
  %317 = vmatpush1.msra.mxu0 0.0
  %318 = vmatprep.subr.mxu0 0.0
  %319 = vmatpush1.msra.mxu0 0.0
  %320 = vmatprep.subr.mxu0 0.0
  %321 = vmatpush1.msra.mxu0 0.0
  %322 = vmatprep.subr.mxu0 0.0
  %323 = vmatpush1.msra.mxu0 0.0
  %324 = vmatprep.subr.mxu0 0.0
  %325 = vmatpush1.msra.mxu0 0.0
  %326 = vmatprep.subr.mxu0 0.0
  %327 = vmatpush1.msra.mxu0 0.0
  %328 = vmatprep.subr.mxu0 0.0
  %329 = vmatpush1.msra.mxu0 0.0
  %330 = vmatprep.subr.mxu0 0.0
  %331 = vmatpush1.msra.mxu0 0.0
  %332 = vmatprep.subr.mxu0 0.0
  %333 = vmatpush1.msra.mxu0 0.0
  %334 = vmatprep.subr.mxu0 0.0
  %335 = vmatpush1.msra.mxu0 0.0
  %336 = vmatprep.subr.mxu0 0.0
  %337 = vmatpush1.msra.mxu0 0.0
  %338 = vmatprep.mubr.f32.mxu0 0.0
  %339 = vmatmul.mubr.f32.gmra.mrb[0].mxu0 %v266
  %v340 = vpop.f32.mrb[0].mxu0
  %v341 = vadd.f32 %v238, %v340
  %v342 = vpop.f32.mrb[0].mxu0
  %343 = vmatprep.mubr.f32.mxu0 0.0
  %344 = vmatmul.mubr.f32.gmra.mrb[0].mxu0 %v268
  %v345 = vpop.f32.mrb[0].mxu0
  %v346 = vadd.f32 %v243, %v345
  %v347 = vpop.f32.mrb[0].mxu0
  %348 = vmatprep.mubr.f32.mxu0 0.0
  %349 = vmatmul.mubr.f32.gmra.mrb[0].mxu0 %v270
  %v350 = vpop.f32.mrb[0].mxu0
  %v351 = vadd.f32 %v248, %v350
  %v352 = vpop.f32.mrb[0].mxu0
  %353 = vmatprep.mubr.f32.mxu0 0.0
  %354 = vmatmul.mubr.f32.gmra.mrb[0].mxu0 %v272
  %v355 = vpop.f32.mrb[0].mxu0
  %v356 = vadd.f32 %v253, %v355
  %v357 = vpop.f32.mrb[0].mxu0
  %358 = vdwg.mxu0
  %s359 = scalar_lea.vmem %s1, 128
  %v360 = vld [vmem:[%s359] sm:$0xff]
  %v361 = vld [vmem:[%s359 + $0x8] sm:$0xff]
  %v362 = vld [vmem:[%s359 + $0x10] sm:$0xff]
  %v363 = vld [vmem:[%s359 + $0x18] sm:$0xff]
  %v364 = vld [vmem:[%s359 + $0x20] sm:$0xff]
  %v365 = vld [vmem:[%s359 + $0x28] sm:$0xff]
  %v366 = vld [vmem:[%s359 + $0x30] sm:$0xff]
  %v367 = vld [vmem:[%s359 + $0x38] sm:$0xff]
  %v369 = vsel %vm158, %v137, 0
  %v372 = vsel %vm158, %v138, 0
  %v375 = vsel %vm158, %v139, 0
  %v378 = vsel %vm158, %v140, 0
  %380 = vmatprep.subr.mxu0 0.0
  %381 = vmatpush1.msra.mxu0 %v360
  %382 = vmatprep.subr.mxu0 0.0
  %383 = vmatpush1.msra.mxu0 %v361
  %384 = vmatprep.subr.mxu0 0.0
  %385 = vmatpush1.msra.mxu0 %v362
  %386 = vmatprep.subr.mxu0 0.0
  %387 = vmatpush1.msra.mxu0 %v363
  %388 = vmatprep.subr.mxu0 0.0
  %389 = vmatpush1.msra.mxu0 %v364
  %390 = vmatprep.subr.mxu0 0.0
  %391 = vmatpush1.msra.mxu0 %v365
  %392 = vmatprep.subr.mxu0 0.0
  %393 = vmatpush1.msra.mxu0 %v366
  %394 = vmatprep.subr.mxu0 0.0
  %395 = vmatpush1.msra.mxu0 %v367
  %396 = vmatprep.subr.mxu0 0.0
  %397 = vmatpush1.msra.mxu0 0.0
  %398 = vmatprep.subr.mxu0 0.0
  %399 = vmatpush1.msra.mxu0 0.0
  %400 = vmatprep.subr.mxu0 0.0
  %401 = vmatpush1.msra.mxu0 0.0
  %402 = vmatprep.subr.mxu0 0.0
  %403 = vmatpush1.msra.mxu0 0.0
  %404 = vmatprep.subr.mxu0 0.0
  %405 = vmatpush1.msra.mxu0 0.0
  %406 = vmatprep.subr.mxu0 0.0
  %407 = vmatpush1.msra.mxu0 0.0
  %408 = vmatprep.subr.mxu0 0.0
  %409 = vmatpush1.msra.mxu0 0.0
  %410 = vmatprep.subr.mxu0 0.0
  %411 = vmatpush1.msra.mxu0 0.0
  %412 = vmatprep.subr.mxu0 0.0
  %413 = vmatpush1.msra.mxu0 0.0
  %414 = vmatprep.subr.mxu0 0.0
  %415 = vmatpush1.msra.mxu0 0.0
  %416 = vmatprep.subr.mxu0 0.0
  %417 = vmatpush1.msra.mxu0 0.0
  %418 = vmatprep.subr.mxu0 0.0
  %419 = vmatpush1.msra.mxu0 0.0
  %420 = vmatprep.subr.mxu0 0.0
  %421 = vmatpush1.msra.mxu0 0.0
  %422 = vmatprep.subr.mxu0 0.0
  %423 = vmatpush1.msra.mxu0 0.0
  %424 = vmatprep.subr.mxu0 0.0
  %425 = vmatpush1.msra.mxu0 0.0
  %426 = vmatprep.subr.mxu0 0.0
  %427 = vmatpush1.msra.mxu0 0.0
  %428 = vmatprep.subr.mxu0 0.0
  %429 = vmatpush1.msra.mxu0 0.0
  %430 = vmatprep.subr.mxu0 0.0
  %431 = vmatpush1.msra.mxu0 0.0
  %432 = vmatprep.subr.mxu0 0.0
  %433 = vmatpush1.msra.mxu0 0.0
  %434 = vmatprep.subr.mxu0 0.0
  %435 = vmatpush1.msra.mxu0 0.0
  %436 = vmatprep.subr.mxu0 0.0
  %437 = vmatpush1.msra.mxu0 0.0
  %438 = vmatprep.subr.mxu0 0.0
  %439 = vmatpush1.msra.mxu0 0.0
  %440 = vmatprep.subr.mxu0 0.0
  %441 = vmatpush1.msra.mxu0 0.0
  %442 = vmatprep.subr.mxu0 0.0
  %443 = vmatpush1.msra.mxu0 0.0
  %444 = vmatprep.mubr.f32.mxu0 0.0
  %445 = vmatmul.mubr.f32.gmra.mrb[0].mxu0 %v369
  %v446 = vpop.f32.mrb[0].mxu0
  %v447 = vadd.f32 0.0, %v446
  %v448 = vpop.f32.mrb[0].mxu0
  %449 = vmatprep.mubr.f32.mxu0 0.0
  %450 = vmatmul.mubr.f32.gmra.mrb[0].mxu0 %v372
  %v451 = vpop.f32.mrb[0].mxu0
  %v452 = vadd.f32 0.0, %v451
  %v453 = vpop.f32.mrb[0].mxu0
  %454 = vmatprep.mubr.f32.mxu0 0.0
  %455 = vmatmul.mubr.f32.gmra.mrb[0].mxu0 %v375
  %v456 = vpop.f32.mrb[0].mxu0
  %v457 = vadd.f32 0.0, %v456
  %v458 = vpop.f32.mrb[0].mxu0
  %459 = vmatprep.mubr.f32.mxu0 0.0
  %460 = vmatmul.mubr.f32.gmra.mrb[0].mxu0 %v378
  %v461 = vpop.f32.mrb[0].mxu0
  %v462 = vadd.f32 0.0, %v461
  %v463 = vpop.f32.mrb[0].mxu0
  %464 = vdwg.mxu0
  %v465 = vadd.f32 %v341, %v447
  %v466 = vadd.f32 %v346, %v452
  %v467 = vadd.f32 %v351, %v457
  %v468 = vadd.f32 %v356, %v462
  %v469 = vadd.f32 %v465, %v466
  %v470 = vadd.f32 %v469, %v467
  %v471 = vadd.f32 %v470, %v468
  %v472 = vrot.slane %v471, 4
  %v473 = vadd.f32 %v471, %v472
  %v474 = vrot.slane %v473, 2
  %v475 = vadd.f32 %v473, %v474
  %v476 = vrot.slane %v475, 1
  %v477 = vadd.f32 %v475, %v476
  %v478 = vmul.f32 %v465, %v465
  %v479 = vmul.f32 %v466, %v466
  %v480 = vmul.f32 %v467, %v467
  %v481 = vmul.f32 %v468, %v468
  %v482 = vadd.f32 %v478, %v479
  %v483 = vadd.f32 %v482, %v480
  %v484 = vadd.f32 %v483, %v481
  %v485 = vrot.slane %v484, 4
  %v486 = vadd.f32 %v484, %v485
  %v487 = vrot.slane %v486, 2
  %v488 = vadd.f32 %v486, %v487
  %v489 = vrot.slane %v488, 1
  %v490 = vadd.f32 %v488, %v489
  %v491 = vld [vmem:[%s7] sm:$0xff]
  %v492 = vld [vmem:[%s7 + $0x8] sm:$0xff]
  %v493 = vld [vmem:[%s7 + $0x10] sm:$0xff]
  %v494 = vld [vmem:[%s7 + $0x18] sm:$0xff]
  %v495 = vld [vmem:[%s7 + $0x20] sm:$0xff]
  %v496 = vld [vmem:[%s7 + $0x28] sm:$0xff]
  %v497 = vld [vmem:[%s7 + $0x30] sm:$0xff]
  %v498 = vld [vmem:[%s7 + $0x38] sm:$0xff]
  %v499 = vld [vmem:[%s7 + $0x40] sm:$0xff]
  %v500 = vld [vmem:[%s7 + $0x48] sm:$0xff]
  %v501 = vld [vmem:[%s7 + $0x50] sm:$0xff]
  %v502 = vld [vmem:[%s7 + $0x58] sm:$0xff]
  %v503 = vld [vmem:[%s7 + $0x60] sm:$0xff]
  %v504 = vld [vmem:[%s7 + $0x68] sm:$0xff]
  %v505 = vld [vmem:[%s7 + $0x70] sm:$0xff]
  %v506 = vld [vmem:[%s7 + $0x78] sm:$0xff]
  %507 = vmatprep.subr.mxu0 0.0
  %508 = vmatpush1.msra.mxu0 %v491
  %509 = vmatprep.subr.mxu0 0.0
  %510 = vmatpush1.msra.mxu0 %v492
  %511 = vmatprep.subr.mxu0 0.0
  %512 = vmatpush1.msra.mxu0 %v493
  %513 = vmatprep.subr.mxu0 0.0
  %514 = vmatpush1.msra.mxu0 %v494
  %515 = vmatprep.subr.mxu0 0.0
  %516 = vmatpush1.msra.mxu0 %v495
  %517 = vmatprep.subr.mxu0 0.0
  %518 = vmatpush1.msra.mxu0 %v496
  %519 = vmatprep.subr.mxu0 0.0
  %520 = vmatpush1.msra.mxu0 %v497
  %521 = vmatprep.subr.mxu0 0.0
  %522 = vmatpush1.msra.mxu0 %v498
  %523 = vmatprep.subr.mxu0 0.0
  %524 = vmatpush1.msra.mxu0 %v499
  %525 = vmatprep.subr.mxu0 0.0
  %526 = vmatpush1.msra.mxu0 %v500
  %527 = vmatprep.subr.mxu0 0.0
  %528 = vmatpush1.msra.mxu0 %v501
  %529 = vmatprep.subr.mxu0 0.0
  %530 = vmatpush1.msra.mxu0 %v502
  %531 = vmatprep.subr.mxu0 0.0
  %532 = vmatpush1.msra.mxu0 %v503
  %533 = vmatprep.subr.mxu0 0.0
  %534 = vmatpush1.msra.mxu0 %v504
  %535 = vmatprep.subr.mxu0 0.0
  %536 = vmatpush1.msra.mxu0 %v505
  %537 = vmatprep.subr.mxu0 0.0
  %538 = vmatpush1.msra.mxu0 %v506
  %539 = vmatprep.subr.mxu0 0.0
  %540 = vmatpush1.msra.mxu0 0.0
  %541 = vmatprep.subr.mxu0 0.0
  %542 = vmatpush1.msra.mxu0 0.0
  %543 = vmatprep.subr.mxu0 0.0
  %544 = vmatpush1.msra.mxu0 0.0
  %545 = vmatprep.subr.mxu0 0.0
  %546 = vmatpush1.msra.mxu0 0.0
  %547 = vmatprep.subr.mxu0 0.0
  %548 = vmatpush1.msra.mxu0 0.0
  %549 = vmatprep.subr.mxu0 0.0
  %550 = vmatpush1.msra.mxu0 0.0
  %551 = vmatprep.subr.mxu0 0.0
  %552 = vmatpush1.msra.mxu0 0.0
  %553 = vmatprep.subr.mxu0 0.0
  %554 = vmatpush1.msra.mxu0 0.0
  %555 = vmatprep.subr.mxu0 0.0
  %556 = vmatpush1.msra.mxu0 0.0
  %557 = vmatprep.subr.mxu0 0.0
  %558 = vmatpush1.msra.mxu0 0.0
  %559 = vmatprep.subr.mxu0 0.0
  %560 = vmatpush1.msra.mxu0 0.0
  %561 = vmatprep.subr.mxu0 0.0
  %562 = vmatpush1.msra.mxu0 0.0
  %563 = vmatprep.subr.mxu0 0.0
  %564 = vmatpush1.msra.mxu0 0.0
  %565 = vmatprep.subr.mxu0 0.0
  %566 = vmatpush1.msra.mxu0 0.0
  %567 = vmatprep.subr.mxu0 0.0
  %568 = vmatpush1.msra.mxu0 0.0
  %569 = vmatprep.subr.mxu0 0.0
  %570 = vmatpush1.msra.mxu0 0.0
  %571 = vmatprep.mubr.f32.mxu0 0.0
  %572 = vmatmul.mubr.f32.gmra.mrb[0].mxu0 %v477
  %v573 = vpop.f32.mrb[0].mxu0
  %v574 = vadd.f32 0.0, %v573
  %v575 = vpop.f32.mrb[0].mxu0
  %576 = vdwg.mxu0
  %577 = vmatprep.subr.mxu0 0.0
  %578 = vmatpush1.msra.mxu0 %v491
  %579 = vmatprep.subr.mxu0 0.0
  %580 = vmatpush1.msra.mxu0 %v492
  %581 = vmatprep.subr.mxu0 0.0
  %582 = vmatpush1.msra.mxu0 %v493
  %583 = vmatprep.subr.mxu0 0.0
  %584 = vmatpush1.msra.mxu0 %v494
  %585 = vmatprep.subr.mxu0 0.0
  %586 = vmatpush1.msra.mxu0 %v495
  %587 = vmatprep.subr.mxu0 0.0
  %588 = vmatpush1.msra.mxu0 %v496
  %589 = vmatprep.subr.mxu0 0.0
  %590 = vmatpush1.msra.mxu0 %v497
  %591 = vmatprep.subr.mxu0 0.0
  %592 = vmatpush1.msra.mxu0 %v498
  %593 = vmatprep.subr.mxu0 0.0
  %594 = vmatpush1.msra.mxu0 %v499
  %595 = vmatprep.subr.mxu0 0.0
  %596 = vmatpush1.msra.mxu0 %v500
  %597 = vmatprep.subr.mxu0 0.0
  %598 = vmatpush1.msra.mxu0 %v501
  %599 = vmatprep.subr.mxu0 0.0
  %600 = vmatpush1.msra.mxu0 %v502
  %601 = vmatprep.subr.mxu0 0.0
  %602 = vmatpush1.msra.mxu0 %v503
  %603 = vmatprep.subr.mxu0 0.0
  %604 = vmatpush1.msra.mxu0 %v504
  %605 = vmatprep.subr.mxu0 0.0
  %606 = vmatpush1.msra.mxu0 %v505
  %607 = vmatprep.subr.mxu0 0.0
  %608 = vmatpush1.msra.mxu0 %v506
  %609 = vmatprep.subr.mxu0 0.0
  %610 = vmatpush1.msra.mxu0 0.0
  %611 = vmatprep.subr.mxu0 0.0
  %612 = vmatpush1.msra.mxu0 0.0
  %613 = vmatprep.subr.mxu0 0.0
  %614 = vmatpush1.msra.mxu0 0.0
  %615 = vmatprep.subr.mxu0 0.0
  %616 = vmatpush1.msra.mxu0 0.0
  %617 = vmatprep.subr.mxu0 0.0
  %618 = vmatpush1.msra.mxu0 0.0
  %619 = vmatprep.subr.mxu0 0.0
  %620 = vmatpush1.msra.mxu0 0.0
  %621 = vmatprep.subr.mxu0 0.0
  %622 = vmatpush1.msra.mxu0 0.0
  %623 = vmatprep.subr.mxu0 0.0
  %624 = vmatpush1.msra.mxu0 0.0
  %625 = vmatprep.subr.mxu0 0.0
  %626 = vmatpush1.msra.mxu0 0.0
  %627 = vmatprep.subr.mxu0 0.0
  %628 = vmatpush1.msra.mxu0 0.0
  %629 = vmatprep.subr.mxu0 0.0
  %630 = vmatpush1.msra.mxu0 0.0
  %631 = vmatprep.subr.mxu0 0.0
  %632 = vmatpush1.msra.mxu0 0.0
  %633 = vmatprep.subr.mxu0 0.0
  %634 = vmatpush1.msra.mxu0 0.0
  %635 = vmatprep.subr.mxu0 0.0
  %636 = vmatpush1.msra.mxu0 0.0
  %637 = vmatprep.subr.mxu0 0.0
  %638 = vmatpush1.msra.mxu0 0.0
  %639 = vmatprep.subr.mxu0 0.0
  %640 = vmatpush1.msra.mxu0 0.0
  %641 = vmatprep.mubr.f32.mxu0 0.0
  %642 = vmatmul.mubr.f32.gmra.mrb[0].mxu0 %v490
  %v643 = vpop.f32.mrb[0].mxu0
  %v644 = vadd.f32 0.0, %v643
  %v645 = vpop.f32.mrb[0].mxu0
  %646 = vdwg.mxu0
  %v647 = vmul.f32 %v574, 0.001953125
  %v648 = vmul.f32 %v644, 0.001953125
  %v649 = vmul.f32 %v647, %v647
  %v650 = vsub.f32 %v648, %v649
  %v651 = vld [vmem:[%s3] sm:$0x1]
  %v652 = vadd.f32 %v650, 1e-05
  %v653 = vrsqrt.pop %v652
  %v654 = vmul.f32 %v651, %v653
  %v655 = vld [vmem:[%s4] sm:$0x1]
  %v656 = vmul.f32 %v647, %v654
  %v657 = vsub.f32 %v655, %v656
  %v658 = vld [vmem:[%s8] sm:$0xff]
  %vm659 = vcmask 64512
  %v661 = vsel %vm659, %v654, 0
  %663 = vmatprep.subr.mxu0 0.0
  %664 = vmatpush1.msra.mxu0 %v658
  %665 = vmatprep.subr.mxu0 0.0
  %666 = vmatpush1.msra.mxu0 0.0
  %667 = vmatprep.subr.mxu0 0.0
  %668 = vmatpush1.msra.mxu0 0.0
  %669 = vmatprep.subr.mxu0 0.0
  %670 = vmatpush1.msra.mxu0 0.0
  %671 = vmatprep.subr.mxu0 0.0
  %672 = vmatpush1.msra.mxu0 0.0
  %673 = vmatprep.subr.mxu0 0.0
  %674 = vmatpush1.msra.mxu0 0.0
  %675 = vmatprep.subr.mxu0 0.0
  %676 = vmatpush1.msra.mxu0 0.0
  %677 = vmatprep.subr.mxu0 0.0
  %678 = vmatpush1.msra.mxu0 0.0
  %679 = vmatprep.subr.mxu0 0.0
  %680 = vmatpush1.msra.mxu0 0.0
  %681 = vmatprep.subr.mxu0 0.0
  %682 = vmatpush1.msra.mxu0 0.0
  %683 = vmatprep.subr.mxu0 0.0
  %684 = vmatpush1.msra.mxu0 0.0
  %685 = vmatprep.subr.mxu0 0.0
  %686 = vmatpush1.msra.mxu0 0.0
  %687 = vmatprep.subr.mxu0 0.0
  %688 = vmatpush1.msra.mxu0 0.0
  %689 = vmatprep.subr.mxu0 0.0
  %690 = vmatpush1.msra.mxu0 0.0
  %691 = vmatprep.subr.mxu0 0.0
  %692 = vmatpush1.msra.mxu0 0.0
  %693 = vmatprep.subr.mxu0 0.0
  %694 = vmatpush1.msra.mxu0 0.0
  %695 = vmatprep.subr.mxu0 0.0
  %696 = vmatpush1.msra.mxu0 0.0
  %697 = vmatprep.subr.mxu0 0.0
  %698 = vmatpush1.msra.mxu0 0.0
  %699 = vmatprep.subr.mxu0 0.0
  %700 = vmatpush1.msra.mxu0 0.0
  %701 = vmatprep.subr.mxu0 0.0
  %702 = vmatpush1.msra.mxu0 0.0
  %703 = vmatprep.subr.mxu0 0.0
  %704 = vmatpush1.msra.mxu0 0.0
  %705 = vmatprep.subr.mxu0 0.0
  %706 = vmatpush1.msra.mxu0 0.0
  %707 = vmatprep.subr.mxu0 0.0
  %708 = vmatpush1.msra.mxu0 0.0
  %709 = vmatprep.subr.mxu0 0.0
  %710 = vmatpush1.msra.mxu0 0.0
  %711 = vmatprep.subr.mxu0 0.0
  %712 = vmatpush1.msra.mxu0 0.0
  %713 = vmatprep.subr.mxu0 0.0
  %714 = vmatpush1.msra.mxu0 0.0
  %715 = vmatprep.subr.mxu0 0.0
  %716 = vmatpush1.msra.mxu0 0.0
  %717 = vmatprep.subr.mxu0 0.0
  %718 = vmatpush1.msra.mxu0 0.0
  %719 = vmatprep.subr.mxu0 0.0
  %720 = vmatpush1.msra.mxu0 0.0
  %721 = vmatprep.subr.mxu0 0.0
  %722 = vmatpush1.msra.mxu0 0.0
  %723 = vmatprep.subr.mxu0 0.0
  %724 = vmatpush1.msra.mxu0 0.0
  %725 = vmatprep.subr.mxu0 0.0
  %726 = vmatpush1.msra.mxu0 0.0
  %727 = vmatprep.mubr.f32.mxu0 0.0
  %728 = vmatmul.mubr.f32.gmra.mrb[0].mxu0 %v661
  %v729 = vpop.f32.mrb[0].mxu0
  %v730 = vadd.f32 0.0, %v729
  %v731 = vpop.f32.mrb[0].mxu0
  %732 = vdwg.mxu0
  %v734 = vsel %vm659, %v657, 0
  %736 = vmatprep.subr.mxu0 0.0
  %737 = vmatpush1.msra.mxu0 %v658
  %738 = vmatprep.subr.mxu0 0.0
  %739 = vmatpush1.msra.mxu0 0.0
  %740 = vmatprep.subr.mxu0 0.0
  %741 = vmatpush1.msra.mxu0 0.0
  %742 = vmatprep.subr.mxu0 0.0
  %743 = vmatpush1.msra.mxu0 0.0
  %744 = vmatprep.subr.mxu0 0.0
  %745 = vmatpush1.msra.mxu0 0.0
  %746 = vmatprep.subr.mxu0 0.0
  %747 = vmatpush1.msra.mxu0 0.0
  %748 = vmatprep.subr.mxu0 0.0
  %749 = vmatpush1.msra.mxu0 0.0
  %750 = vmatprep.subr.mxu0 0.0
  %751 = vmatpush1.msra.mxu0 0.0
  %752 = vmatprep.subr.mxu0 0.0
  %753 = vmatpush1.msra.mxu0 0.0
  %754 = vmatprep.subr.mxu0 0.0
  %755 = vmatpush1.msra.mxu0 0.0
  %756 = vmatprep.subr.mxu0 0.0
  %757 = vmatpush1.msra.mxu0 0.0
  %758 = vmatprep.subr.mxu0 0.0
  %759 = vmatpush1.msra.mxu0 0.0
  %760 = vmatprep.subr.mxu0 0.0
  %761 = vmatpush1.msra.mxu0 0.0
  %762 = vmatprep.subr.mxu0 0.0
  %763 = vmatpush1.msra.mxu0 0.0
  %764 = vmatprep.subr.mxu0 0.0
  %765 = vmatpush1.msra.mxu0 0.0
  %766 = vmatprep.subr.mxu0 0.0
  %767 = vmatpush1.msra.mxu0 0.0
  %768 = vmatprep.subr.mxu0 0.0
  %769 = vmatpush1.msra.mxu0 0.0
  %770 = vmatprep.subr.mxu0 0.0
  %771 = vmatpush1.msra.mxu0 0.0
  %772 = vmatprep.subr.mxu0 0.0
  %773 = vmatpush1.msra.mxu0 0.0
  %774 = vmatprep.subr.mxu0 0.0
  %775 = vmatpush1.msra.mxu0 0.0
  %776 = vmatprep.subr.mxu0 0.0
  %777 = vmatpush1.msra.mxu0 0.0
  %778 = vmatprep.subr.mxu0 0.0
  %779 = vmatpush1.msra.mxu0 0.0
  %780 = vmatprep.subr.mxu0 0.0
  %781 = vmatpush1.msra.mxu0 0.0
  %782 = vmatprep.subr.mxu0 0.0
  %783 = vmatpush1.msra.mxu0 0.0
  %784 = vmatprep.subr.mxu0 0.0
  %785 = vmatpush1.msra.mxu0 0.0
  %786 = vmatprep.subr.mxu0 0.0
  %787 = vmatpush1.msra.mxu0 0.0
  %788 = vmatprep.subr.mxu0 0.0
  %789 = vmatpush1.msra.mxu0 0.0
  %790 = vmatprep.subr.mxu0 0.0
  %791 = vmatpush1.msra.mxu0 0.0
  %792 = vmatprep.subr.mxu0 0.0
  %793 = vmatpush1.msra.mxu0 0.0
  %794 = vmatprep.subr.mxu0 0.0
  %795 = vmatpush1.msra.mxu0 0.0
  %796 = vmatprep.subr.mxu0 0.0
  %797 = vmatpush1.msra.mxu0 0.0
  %798 = vmatprep.subr.mxu0 0.0
  %799 = vmatpush1.msra.mxu0 0.0
  %800 = vmatprep.mubr.f32.mxu0 0.0
  %801 = vmatmul.mubr.f32.gmra.mrb[0].mxu0 %v734
  %v802 = vpop.f32.mrb[0].mxu0
  %v803 = vadd.f32 0.0, %v802
  %v804 = vpop.f32.mrb[0].mxu0
  %805 = vdwg.mxu0
  %v806 = vlaneseq
  %v807 = vshrl.u32 %v806, 7
  %v808 = vsub.s32 0, %v807
  %v809 = vrot.slane %v730, %v808
  %v810 = vmul.f32 %v465, %v809
  %v811 = vmul.f32 %v466, %v809
  %v812 = vmul.f32 %v467, %v809
  %v813 = vmul.f32 %v468, %v809
  %v814 = vlaneseq
  %v815 = vshrl.u32 %v814, 7
  %v816 = vsub.s32 0, %v815
  %v817 = vrot.slane %v803, %v816
  %v818 = vadd.f32 %v810, %v817
  %v819 = vadd.f32 %v811, %v817
  %v820 = vadd.f32 %v812, %v817
  %v821 = vadd.f32 %v813, %v817
  %v822 = vmax.f32 %v818, 0.0
  %v823 = vmax.f32 %v819, 0.0
  %v824 = vmax.f32 %v820, 0.0
  %v825 = vmax.f32 %v821, 0.0
  %826 = vst [vmem:[#allocation2] sm:$0x1] 0.0
  %827 = vst [vmem:[#allocation2 + $0x21] sm:$0x1] 0.0
  %828 = vst [vmem:[#allocation2 + $0x1] sm:$0xff] %v822
  %829 = vst [vmem:[#allocation2 + $0x9] sm:$0xff] %v823
  %830 = vst [vmem:[#allocation2 + $0x11] sm:$0xff] %v824
  %831 = vst [vmem:[#allocation2 + $0x19] sm:$0xff] %v825
  %v832 = vld [vmem:[#allocation2] sm:$0xff]
  %v833 = vld [vmem:[#allocation2 + $0x8] sm:$0xff]
  %v834 = vld [vmem:[#allocation2 + $0x10] sm:$0xff]
  %v835 = vld [vmem:[#allocation2 + $0x18] sm:$0xff]
  %v836 = vld [vmem:[#allocation2 + $0x20] sm:$0x3]
  %v837 = vsel %vm102, %v832, 0.0
  %v838 = vsel %vm103, %v833, 0.0
  %v839 = vsel %vm104, %v834, 0.0
  %v840 = vsel %vm105, %v835, 0.0
  %v846 = vrot.slane %v832, 2
  %v847 = vrot.slane %v833, 2
  %v848 = vsel %vm123, %v846, %v847
  %v849 = vrot.slane %v834, 2
  %v850 = vsel %vm123, %v847, %v849
  %v851 = vrot.slane %v835, 2
  %v852 = vsel %vm123, %v849, %v851
  %v853 = vrot.slane %v836, 2
  %v854 = vsel %vm123, %v851, %v853
  %v859 = vsel %vm114, %v848, 0.0
  %v860 = vsel %vm115, %v850, 0.0
  %v861 = vsel %vm116, %v852, 0.0
  %v862 = vsel %vm117, %v854, 0.0
  %s863 = scalar_lea.vmem %s2, 128
  %v864 = vld [vmem:[%s863] sm:$0xff]
  %v865 = vld [vmem:[%s863 + $0x8] sm:$0xff]
  %v866 = vld [vmem:[%s863 + $0x10] sm:$0xff]
  %v867 = vld [vmem:[%s863 + $0x18] sm:$0xff]
  %v868 = vld [vmem:[%s863 + $0x20] sm:$0xff]
  %v869 = vld [vmem:[%s863 + $0x28] sm:$0xff]
  %v870 = vld [vmem:[%s863 + $0x30] sm:$0xff]
  %v871 = vld [vmem:[%s863 + $0x38] sm:$0xff]
  %v872 = vld [vmem:[%s863 + $0x40] sm:$0xff]
  %v873 = vld [vmem:[%s863 + $0x48] sm:$0xff]
  %v874 = vld [vmem:[%s863 + $0x50] sm:$0xff]
  %v875 = vld [vmem:[%s863 + $0x58] sm:$0xff]
  %v876 = vld [vmem:[%s863 + $0x60] sm:$0xff]
  %v877 = vld [vmem:[%s863 + $0x68] sm:$0xff]
  %v878 = vld [vmem:[%s863 + $0x70] sm:$0xff]
  %v879 = vld [vmem:[%s863 + $0x78] sm:$0xff]
  %v880 = vld [vmem:[%s2] sm:$0xff]
  %v881 = vld [vmem:[%s2 + $0x8] sm:$0xff]
  %v882 = vld [vmem:[%s2 + $0x10] sm:$0xff]
  %v883 = vld [vmem:[%s2 + $0x18] sm:$0xff]
  %v884 = vld [vmem:[%s2 + $0x20] sm:$0xff]
  %v885 = vld [vmem:[%s2 + $0x28] sm:$0xff]
  %v886 = vld [vmem:[%s2 + $0x30] sm:$0xff]
  %v887 = vld [vmem:[%s2 + $0x38] sm:$0xff]
  %v888 = vld [vmem:[%s2 + $0x40] sm:$0xff]
  %v889 = vld [vmem:[%s2 + $0x48] sm:$0xff]
  %v890 = vld [vmem:[%s2 + $0x50] sm:$0xff]
  %v891 = vld [vmem:[%s2 + $0x58] sm:$0xff]
  %v892 = vld [vmem:[%s2 + $0x60] sm:$0xff]
  %v893 = vld [vmem:[%s2 + $0x68] sm:$0xff]
  %v894 = vld [vmem:[%s2 + $0x70] sm:$0xff]
  %v895 = vld [vmem:[%s2 + $0x78] sm:$0xff]
  %896 = vmatprep.subr.mxu0 0.0
  %897 = vmatpush1.msra.mxu0 %v880
  %898 = vmatprep.subr.mxu0 0.0
  %899 = vmatpush1.msra.mxu0 %v881
  %900 = vmatprep.subr.mxu0 0.0
  %901 = vmatpush1.msra.mxu0 %v882
  %902 = vmatprep.subr.mxu0 0.0
  %903 = vmatpush1.msra.mxu0 %v883
  %904 = vmatprep.subr.mxu0 0.0
  %905 = vmatpush1.msra.mxu0 %v884
  %906 = vmatprep.subr.mxu0 0.0
  %907 = vmatpush1.msra.mxu0 %v885
  %908 = vmatprep.subr.mxu0 0.0
  %909 = vmatpush1.msra.mxu0 %v886
  %910 = vmatprep.subr.mxu0 0.0
  %911 = vmatpush1.msra.mxu0 %v887
  %912 = vmatprep.subr.mxu0 0.0
  %913 = vmatpush1.msra.mxu0 %v888
  %914 = vmatprep.subr.mxu0 0.0
  %915 = vmatpush1.msra.mxu0 %v889
  %916 = vmatprep.subr.mxu0 0.0
  %917 = vmatpush1.msra.mxu0 %v890
  %918 = vmatprep.subr.mxu0 0.0
  %919 = vmatpush1.msra.mxu0 %v891
  %920 = vmatprep.subr.mxu0 0.0
  %921 = vmatpush1.msra.mxu0 %v892
  %922 = vmatprep.subr.mxu0 0.0
  %923 = vmatpush1.msra.mxu0 %v893
  %924 = vmatprep.subr.mxu0 0.0
  %925 = vmatpush1.msra.mxu0 %v894
  %926 = vmatprep.subr.mxu0 0.0
  %927 = vmatpush1.msra.mxu0 %v895
  %928 = vmatprep.subr.mxu0 0.0
  %929 = vmatpush1.msra.mxu0 0.0
  %930 = vmatprep.subr.mxu0 0.0
  %931 = vmatpush1.msra.mxu0 0.0
  %932 = vmatprep.subr.mxu0 0.0
  %933 = vmatpush1.msra.mxu0 0.0
  %934 = vmatprep.subr.mxu0 0.0
  %935 = vmatpush1.msra.mxu0 0.0
  %936 = vmatprep.subr.mxu0 0.0
  %937 = vmatpush1.msra.mxu0 0.0
  %938 = vmatprep.subr.mxu0 0.0
  %939 = vmatpush1.msra.mxu0 0.0
  %940 = vmatprep.subr.mxu0 0.0
  %941 = vmatpush1.msra.mxu0 0.0
  %942 = vmatprep.subr.mxu0 0.0
  %943 = vmatpush1.msra.mxu0 0.0
  %944 = vmatprep.subr.mxu0 0.0
  %945 = vmatpush1.msra.mxu0 0.0
  %946 = vmatprep.subr.mxu0 0.0
  %947 = vmatpush1.msra.mxu0 0.0
  %948 = vmatprep.subr.mxu0 0.0
  %949 = vmatpush1.msra.mxu0 0.0
  %950 = vmatprep.subr.mxu0 0.0
  %951 = vmatpush1.msra.mxu0 0.0
  %952 = vmatprep.subr.mxu0 0.0
  %953 = vmatpush1.msra.mxu0 0.0
  %954 = vmatprep.subr.mxu0 0.0
  %955 = vmatpush1.msra.mxu0 0.0
  %956 = vmatprep.subr.mxu0 0.0
  %957 = vmatpush1.msra.mxu0 0.0
  %958 = vmatprep.subr.mxu0 0.0
  %959 = vmatpush1.msra.mxu0 0.0
  %960 = vmatprep.mubr.f32.mxu0 0.0
  %961 = vmatmul.mubr.f32.gmra.mrb[0].mxu0 %v837
  %v962 = vpop.f32.mrb[0].mxu0
  %v963 = vadd.f32 0.0, %v962
  %v964 = vpop.f32.mrb[0].mxu0
  %965 = vmatprep.mubr.f32.mxu0 0.0
  %966 = vmatmul.mubr.f32.gmra.mrb[0].mxu0 %v838
  %v967 = vpop.f32.mrb[0].mxu0
  %v968 = vadd.f32 0.0, %v967
  %v969 = vpop.f32.mrb[0].mxu0
  %970 = vmatprep.mubr.f32.mxu0 0.0
  %971 = vmatmul.mubr.f32.gmra.mrb[0].mxu0 %v839
  %v972 = vpop.f32.mrb[0].mxu0
  %v973 = vadd.f32 0.0, %v972
  %v974 = vpop.f32.mrb[0].mxu0
  %975 = vmatprep.mubr.f32.mxu0 0.0
  %976 = vmatmul.mubr.f32.gmra.mrb[0].mxu0 %v840
  %v977 = vpop.f32.mrb[0].mxu0
  %v978 = vadd.f32 0.0, %v977
  %v979 = vpop.f32.mrb[0].mxu0
  %980 = vdwg.mxu0
  %v981 = vrot.slane %v832, 1
  %v982 = vrot.slane %v833, 1
  %v983 = vsel %vm256, %v981, %v982
  %v984 = vrot.slane %v834, 1
  %v985 = vsel %vm256, %v982, %v984
  %v986 = vrot.slane %v835, 1
  %v987 = vsel %vm256, %v984, %v986
  %v988 = vrot.slane %v836, 1
  %v989 = vsel %vm256, %v986, %v988
  %994 = vmatprep.subr.mxu0 0.0
  %995 = vmatpush1.msra.mxu0 %v864
  %996 = vmatprep.subr.mxu0 0.0
  %997 = vmatpush1.msra.mxu0 %v865
  %998 = vmatprep.subr.mxu0 0.0
  %999 = vmatpush1.msra.mxu0 %v866
  %1000 = vmatprep.subr.mxu0 0.0
  %1001 = vmatpush1.msra.mxu0 %v867
  %1002 = vmatprep.subr.mxu0 0.0
  %1003 = vmatpush1.msra.mxu0 %v868
  %1004 = vmatprep.subr.mxu0 0.0
  %1005 = vmatpush1.msra.mxu0 %v869
  %1006 = vmatprep.subr.mxu0 0.0
  %1007 = vmatpush1.msra.mxu0 %v870
  %1008 = vmatprep.subr.mxu0 0.0
  %1009 = vmatpush1.msra.mxu0 %v871
  %1010 = vmatprep.subr.mxu0 0.0
  %1011 = vmatpush1.msra.mxu0 %v872
  %1012 = vmatprep.subr.mxu0 0.0
  %1013 = vmatpush1.msra.mxu0 %v873
  %1014 = vmatprep.subr.mxu0 0.0
  %1015 = vmatpush1.msra.mxu0 %v874
  %1016 = vmatprep.subr.mxu0 0.0
  %1017 = vmatpush1.msra.mxu0 %v875
  %1018 = vmatprep.subr.mxu0 0.0
  %1019 = vmatpush1.msra.mxu0 %v876
  %1020 = vmatprep.subr.mxu0 0.0
  %1021 = vmatpush1.msra.mxu0 %v877
  %1022 = vmatprep.subr.mxu0 0.0
  %1023 = vmatpush1.msra.mxu0 %v878
  %1024 = vmatprep.subr.mxu0 0.0
  %1025 = vmatpush1.msra.mxu0 %v879
  %1026 = vmatprep.subr.mxu0 0.0
  %1027 = vmatpush1.msra.mxu0 0.0
  %1028 = vmatprep.subr.mxu0 0.0
  %1029 = vmatpush1.msra.mxu0 0.0
  %1030 = vmatprep.subr.mxu0 0.0
  %1031 = vmatpush1.msra.mxu0 0.0
  %1032 = vmatprep.subr.mxu0 0.0
  %1033 = vmatpush1.msra.mxu0 0.0
  %1034 = vmatprep.subr.mxu0 0.0
  %1035 = vmatpush1.msra.mxu0 0.0
  %1036 = vmatprep.subr.mxu0 0.0
  %1037 = vmatpush1.msra.mxu0 0.0
  %1038 = vmatprep.subr.mxu0 0.0
  %1039 = vmatpush1.msra.mxu0 0.0
  %1040 = vmatprep.subr.mxu0 0.0
  %1041 = vmatpush1.msra.mxu0 0.0
  %1042 = vmatprep.subr.mxu0 0.0
  %1043 = vmatpush1.msra.mxu0 0.0
  %1044 = vmatprep.subr.mxu0 0.0
  %1045 = vmatpush1.msra.mxu0 0.0
  %1046 = vmatprep.subr.mxu0 0.0
  %1047 = vmatpush1.msra.mxu0 0.0
  %1048 = vmatprep.subr.mxu0 0.0
  %1049 = vmatpush1.msra.mxu0 0.0
  %1050 = vmatprep.subr.mxu0 0.0
  %1051 = vmatpush1.msra.mxu0 0.0
  %1052 = vmatprep.subr.mxu0 0.0
  %1053 = vmatpush1.msra.mxu0 0.0
  %1054 = vmatprep.subr.mxu0 0.0
  %1055 = vmatpush1.msra.mxu0 0.0
  %1056 = vmatprep.subr.mxu0 0.0
  %1057 = vmatpush1.msra.mxu0 0.0
  %1058 = vmatprep.mubr.f32.mxu0 0.0
  %1059 = vmatmul.mubr.f32.gmra.mrb[0].mxu0 %v983
  %v1060 = vpop.f32.mrb[0].mxu0
  %v1061 = vadd.f32 %v963, %v1060
  %v1062 = vpop.f32.mrb[0].mxu0
  %1063 = vmatprep.mubr.f32.mxu0 0.0
  %1064 = vmatmul.mubr.f32.gmra.mrb[0].mxu0 %v985
  %v1065 = vpop.f32.mrb[0].mxu0
  %v1066 = vadd.f32 %v968, %v1065
  %v1067 = vpop.f32.mrb[0].mxu0
  %1068 = vmatprep.mubr.f32.mxu0 0.0
  %1069 = vmatmul.mubr.f32.gmra.mrb[0].mxu0 %v987
  %v1070 = vpop.f32.mrb[0].mxu0
  %v1071 = vadd.f32 %v973, %v1070
  %v1072 = vpop.f32.mrb[0].mxu0
  %1073 = vmatprep.mubr.f32.mxu0 0.0
  %1074 = vmatmul.mubr.f32.gmra.mrb[0].mxu0 %v989
  %v1075 = vpop.f32.mrb[0].mxu0
  %v1076 = vadd.f32 %v978, %v1075
  %v1077 = vpop.f32.mrb[0].mxu0
  %1078 = vdwg.mxu0
  %s1079 = scalar_lea.vmem %s2, 256
  %v1080 = vld [vmem:[%s1079] sm:$0xff]
  %v1081 = vld [vmem:[%s1079 + $0x8] sm:$0xff]
  %v1082 = vld [vmem:[%s1079 + $0x10] sm:$0xff]
  %v1083 = vld [vmem:[%s1079 + $0x18] sm:$0xff]
  %v1084 = vld [vmem:[%s1079 + $0x20] sm:$0xff]
  %v1085 = vld [vmem:[%s1079 + $0x28] sm:$0xff]
  %v1086 = vld [vmem:[%s1079 + $0x30] sm:$0xff]
  %v1087 = vld [vmem:[%s1079 + $0x38] sm:$0xff]
  %v1088 = vld [vmem:[%s1079 + $0x40] sm:$0xff]
  %v1089 = vld [vmem:[%s1079 + $0x48] sm:$0xff]
  %v1090 = vld [vmem:[%s1079 + $0x50] sm:$0xff]
  %v1091 = vld [vmem:[%s1079 + $0x58] sm:$0xff]
  %v1092 = vld [vmem:[%s1079 + $0x60] sm:$0xff]
  %v1093 = vld [vmem:[%s1079 + $0x68] sm:$0xff]
  %v1094 = vld [vmem:[%s1079 + $0x70] sm:$0xff]
  %v1095 = vld [vmem:[%s1079 + $0x78] sm:$0xff]
  %1096 = vmatprep.subr.mxu0 0.0
  %1097 = vmatpush1.msra.mxu0 %v1080
  %1098 = vmatprep.subr.mxu0 0.0
  %1099 = vmatpush1.msra.mxu0 %v1081
  %1100 = vmatprep.subr.mxu0 0.0
  %1101 = vmatpush1.msra.mxu0 %v1082
  %1102 = vmatprep.subr.mxu0 0.0
  %1103 = vmatpush1.msra.mxu0 %v1083
  %1104 = vmatprep.subr.mxu0 0.0
  %1105 = vmatpush1.msra.mxu0 %v1084
  %1106 = vmatprep.subr.mxu0 0.0
  %1107 = vmatpush1.msra.mxu0 %v1085
  %1108 = vmatprep.subr.mxu0 0.0
  %1109 = vmatpush1.msra.mxu0 %v1086
  %1110 = vmatprep.subr.mxu0 0.0
  %1111 = vmatpush1.msra.mxu0 %v1087
  %1112 = vmatprep.subr.mxu0 0.0
  %1113 = vmatpush1.msra.mxu0 %v1088
  %1114 = vmatprep.subr.mxu0 0.0
  %1115 = vmatpush1.msra.mxu0 %v1089
  %1116 = vmatprep.subr.mxu0 0.0
  %1117 = vmatpush1.msra.mxu0 %v1090
  %1118 = vmatprep.subr.mxu0 0.0
  %1119 = vmatpush1.msra.mxu0 %v1091
  %1120 = vmatprep.subr.mxu0 0.0
  %1121 = vmatpush1.msra.mxu0 %v1092
  %1122 = vmatprep.subr.mxu0 0.0
  %1123 = vmatpush1.msra.mxu0 %v1093
  %1124 = vmatprep.subr.mxu0 0.0
  %1125 = vmatpush1.msra.mxu0 %v1094
  %1126 = vmatprep.subr.mxu0 0.0
  %1127 = vmatpush1.msra.mxu0 %v1095
  %1128 = vmatprep.subr.mxu0 0.0
  %1129 = vmatpush1.msra.mxu0 0.0
  %1130 = vmatprep.subr.mxu0 0.0
  %1131 = vmatpush1.msra.mxu0 0.0
  %1132 = vmatprep.subr.mxu0 0.0
  %1133 = vmatpush1.msra.mxu0 0.0
  %1134 = vmatprep.subr.mxu0 0.0
  %1135 = vmatpush1.msra.mxu0 0.0
  %1136 = vmatprep.subr.mxu0 0.0
  %1137 = vmatpush1.msra.mxu0 0.0
  %1138 = vmatprep.subr.mxu0 0.0
  %1139 = vmatpush1.msra.mxu0 0.0
  %1140 = vmatprep.subr.mxu0 0.0
  %1141 = vmatpush1.msra.mxu0 0.0
  %1142 = vmatprep.subr.mxu0 0.0
  %1143 = vmatpush1.msra.mxu0 0.0
  %1144 = vmatprep.subr.mxu0 0.0
  %1145 = vmatpush1.msra.mxu0 0.0
  %1146 = vmatprep.subr.mxu0 0.0
  %1147 = vmatpush1.msra.mxu0 0.0
  %1148 = vmatprep.subr.mxu0 0.0
  %1149 = vmatpush1.msra.mxu0 0.0
  %1150 = vmatprep.subr.mxu0 0.0
  %1151 = vmatpush1.msra.mxu0 0.0
  %1152 = vmatprep.subr.mxu0 0.0
  %1153 = vmatpush1.msra.mxu0 0.0
  %1154 = vmatprep.subr.mxu0 0.0
  %1155 = vmatpush1.msra.mxu0 0.0
  %1156 = vmatprep.subr.mxu0 0.0
  %1157 = vmatpush1.msra.mxu0 0.0
  %1158 = vmatprep.subr.mxu0 0.0
  %1159 = vmatpush1.msra.mxu0 0.0
  %1160 = vmatprep.mubr.f32.mxu0 0.0
  %1161 = vmatmul.mubr.f32.gmra.mrb[0].mxu0 %v859
  %v1162 = vpop.f32.mrb[0].mxu0
  %v1163 = vadd.f32 0.0, %v1162
  %v1164 = vpop.f32.mrb[0].mxu0
  %1165 = vmatprep.mubr.f32.mxu0 0.0
  %1166 = vmatmul.mubr.f32.gmra.mrb[0].mxu0 %v860
  %v1167 = vpop.f32.mrb[0].mxu0
  %v1168 = vadd.f32 0.0, %v1167
  %v1169 = vpop.f32.mrb[0].mxu0
  %1170 = vmatprep.mubr.f32.mxu0 0.0
  %1171 = vmatmul.mubr.f32.gmra.mrb[0].mxu0 %v861
  %v1172 = vpop.f32.mrb[0].mxu0
  %v1173 = vadd.f32 0.0, %v1172
  %v1174 = vpop.f32.mrb[0].mxu0
  %1175 = vmatprep.mubr.f32.mxu0 0.0
  %1176 = vmatmul.mubr.f32.gmra.mrb[0].mxu0 %v862
  %v1177 = vpop.f32.mrb[0].mxu0
  %v1178 = vadd.f32 0.0, %v1177
  %v1179 = vpop.f32.mrb[0].mxu0
  %1180 = vdwg.mxu0
  %v1181 = vadd.f32 %v1061, %v1163
  %v1182 = vadd.f32 %v1066, %v1168
  %v1183 = vadd.f32 %v1071, %v1173
  %v1184 = vadd.f32 %v1076, %v1178
  %v1185 = vadd.f32 %v1181, %v1182
  %v1186 = vadd.f32 %v1185, %v1183
  %v1187 = vadd.f32 %v1186, %v1184
  %v1188 = vrot.slane %v1187, 4
  %v1189 = vadd.f32 %v1187, %v1188
  %v1190 = vrot.slane %v1189, 2
  %v1191 = vadd.f32 %v1189, %v1190
  %v1192 = vrot.slane %v1191, 1
  %v1193 = vadd.f32 %v1191, %v1192
  %v1194 = vmul.f32 %v1181, %v1181
  %v1195 = vmul.f32 %v1182, %v1182
  %v1196 = vmul.f32 %v1183, %v1183
  %v1197 = vmul.f32 %v1184, %v1184
  %v1198 = vadd.f32 %v1194, %v1195
  %v1199 = vadd.f32 %v1198, %v1196
  %v1200 = vadd.f32 %v1199, %v1197
  %v1201 = vrot.slane %v1200, 4
  %v1202 = vadd.f32 %v1200, %v1201
  %v1203 = vrot.slane %v1202, 2
  %v1204 = vadd.f32 %v1202, %v1203
  %v1205 = vrot.slane %v1204, 1
  %v1206 = vadd.f32 %v1204, %v1205
  %v1207 = vld [vmem:[%s7] sm:$0xff]
  %v1208 = vld [vmem:[%s7 + $0x8] sm:$0xff]
  %v1209 = vld [vmem:[%s7 + $0x10] sm:$0xff]
  %v1210 = vld [vmem:[%s7 + $0x18] sm:$0xff]
  %v1211 = vld [vmem:[%s7 + $0x20] sm:$0xff]
  %v1212 = vld [vmem:[%s7 + $0x28] sm:$0xff]
  %v1213 = vld [vmem:[%s7 + $0x30] sm:$0xff]
  %v1214 = vld [vmem:[%s7 + $0x38] sm:$0xff]
  %v1215 = vld [vmem:[%s7 + $0x40] sm:$0xff]
  %v1216 = vld [vmem:[%s7 + $0x48] sm:$0xff]
  %v1217 = vld [vmem:[%s7 + $0x50] sm:$0xff]
  %v1218 = vld [vmem:[%s7 + $0x58] sm:$0xff]
  %v1219 = vld [vmem:[%s7 + $0x60] sm:$0xff]
  %v1220 = vld [vmem:[%s7 + $0x68] sm:$0xff]
  %v1221 = vld [vmem:[%s7 + $0x70] sm:$0xff]
  %v1222 = vld [vmem:[%s7 + $0x78] sm:$0xff]
  %1223 = vmatprep.subr.mxu0 0.0
  %1224 = vmatpush1.msra.mxu0 %v1207
  %1225 = vmatprep.subr.mxu0 0.0
  %1226 = vmatpush1.msra.mxu0 %v1208
  %1227 = vmatprep.subr.mxu0 0.0
  %1228 = vmatpush1.msra.mxu0 %v1209
  %1229 = vmatprep.subr.mxu0 0.0
  %1230 = vmatpush1.msra.mxu0 %v1210
  %1231 = vmatprep.subr.mxu0 0.0
  %1232 = vmatpush1.msra.mxu0 %v1211
  %1233 = vmatprep.subr.mxu0 0.0
  %1234 = vmatpush1.msra.mxu0 %v1212
  %1235 = vmatprep.subr.mxu0 0.0
  %1236 = vmatpush1.msra.mxu0 %v1213
  %1237 = vmatprep.subr.mxu0 0.0
  %1238 = vmatpush1.msra.mxu0 %v1214
  %1239 = vmatprep.subr.mxu0 0.0
  %1240 = vmatpush1.msra.mxu0 %v1215
  %1241 = vmatprep.subr.mxu0 0.0
  %1242 = vmatpush1.msra.mxu0 %v1216
  %1243 = vmatprep.subr.mxu0 0.0
  %1244 = vmatpush1.msra.mxu0 %v1217
  %1245 = vmatprep.subr.mxu0 0.0
  %1246 = vmatpush1.msra.mxu0 %v1218
  %1247 = vmatprep.subr.mxu0 0.0
  %1248 = vmatpush1.msra.mxu0 %v1219
  %1249 = vmatprep.subr.mxu0 0.0
  %1250 = vmatpush1.msra.mxu0 %v1220
  %1251 = vmatprep.subr.mxu0 0.0
  %1252 = vmatpush1.msra.mxu0 %v1221
  %1253 = vmatprep.subr.mxu0 0.0
  %1254 = vmatpush1.msra.mxu0 %v1222
  %1255 = vmatprep.subr.mxu0 0.0
  %1256 = vmatpush1.msra.mxu0 0.0
  %1257 = vmatprep.subr.mxu0 0.0
  %1258 = vmatpush1.msra.mxu0 0.0
  %1259 = vmatprep.subr.mxu0 0.0
  %1260 = vmatpush1.msra.mxu0 0.0
  %1261 = vmatprep.subr.mxu0 0.0
  %1262 = vmatpush1.msra.mxu0 0.0
  %1263 = vmatprep.subr.mxu0 0.0
  %1264 = vmatpush1.msra.mxu0 0.0
  %1265 = vmatprep.subr.mxu0 0.0
  %1266 = vmatpush1.msra.mxu0 0.0
  %1267 = vmatprep.subr.mxu0 0.0
  %1268 = vmatpush1.msra.mxu0 0.0
  %1269 = vmatprep.subr.mxu0 0.0
  %1270 = vmatpush1.msra.mxu0 0.0
  %1271 = vmatprep.subr.mxu0 0.0
  %1272 = vmatpush1.msra.mxu0 0.0
  %1273 = vmatprep.subr.mxu0 0.0
  %1274 = vmatpush1.msra.mxu0 0.0
  %1275 = vmatprep.subr.mxu0 0.0
  %1276 = vmatpush1.msra.mxu0 0.0
  %1277 = vmatprep.subr.mxu0 0.0
  %1278 = vmatpush1.msra.mxu0 0.0
  %1279 = vmatprep.subr.mxu0 0.0
  %1280 = vmatpush1.msra.mxu0 0.0
  %1281 = vmatprep.subr.mxu0 0.0
  %1282 = vmatpush1.msra.mxu0 0.0
  %1283 = vmatprep.subr.mxu0 0.0
  %1284 = vmatpush1.msra.mxu0 0.0
  %1285 = vmatprep.subr.mxu0 0.0
  %1286 = vmatpush1.msra.mxu0 0.0
  %1287 = vmatprep.mubr.f32.mxu0 0.0
  %1288 = vmatmul.mubr.f32.gmra.mrb[0].mxu0 %v1193
  %v1289 = vpop.f32.mrb[0].mxu0
  %v1290 = vadd.f32 0.0, %v1289
  %v1291 = vpop.f32.mrb[0].mxu0
  %1292 = vdwg.mxu0
  %1293 = vmatprep.subr.mxu0 0.0
  %1294 = vmatpush1.msra.mxu0 %v1207
  %1295 = vmatprep.subr.mxu0 0.0
  %1296 = vmatpush1.msra.mxu0 %v1208
  %1297 = vmatprep.subr.mxu0 0.0
  %1298 = vmatpush1.msra.mxu0 %v1209
  %1299 = vmatprep.subr.mxu0 0.0
  %1300 = vmatpush1.msra.mxu0 %v1210
  %1301 = vmatprep.subr.mxu0 0.0
  %1302 = vmatpush1.msra.mxu0 %v1211
  %1303 = vmatprep.subr.mxu0 0.0
  %1304 = vmatpush1.msra.mxu0 %v1212
  %1305 = vmatprep.subr.mxu0 0.0
  %1306 = vmatpush1.msra.mxu0 %v1213
  %1307 = vmatprep.subr.mxu0 0.0
  %1308 = vmatpush1.msra.mxu0 %v1214
  %1309 = vmatprep.subr.mxu0 0.0
  %1310 = vmatpush1.msra.mxu0 %v1215
  %1311 = vmatprep.subr.mxu0 0.0
  %1312 = vmatpush1.msra.mxu0 %v1216
  %1313 = vmatprep.subr.mxu0 0.0
  %1314 = vmatpush1.msra.mxu0 %v1217
  %1315 = vmatprep.subr.mxu0 0.0
  %1316 = vmatpush1.msra.mxu0 %v1218
  %1317 = vmatprep.subr.mxu0 0.0
  %1318 = vmatpush1.msra.mxu0 %v1219
  %1319 = vmatprep.subr.mxu0 0.0
  %1320 = vmatpush1.msra.mxu0 %v1220
  %1321 = vmatprep.subr.mxu0 0.0
  %1322 = vmatpush1.msra.mxu0 %v1221
  %1323 = vmatprep.subr.mxu0 0.0
  %1324 = vmatpush1.msra.mxu0 %v1222
  %1325 = vmatprep.subr.mxu0 0.0
  %1326 = vmatpush1.msra.mxu0 0.0
  %1327 = vmatprep.subr.mxu0 0.0
  %1328 = vmatpush1.msra.mxu0 0.0
  %1329 = vmatprep.subr.mxu0 0.0
  %1330 = vmatpush1.msra.mxu0 0.0
  %1331 = vmatprep.subr.mxu0 0.0
  %1332 = vmatpush1.msra.mxu0 0.0
  %1333 = vmatprep.subr.mxu0 0.0
  %1334 = vmatpush1.msra.mxu0 0.0
  %1335 = vmatprep.subr.mxu0 0.0
  %1336 = vmatpush1.msra.mxu0 0.0
  %1337 = vmatprep.subr.mxu0 0.0
  %1338 = vmatpush1.msra.mxu0 0.0
  %1339 = vmatprep.subr.mxu0 0.0
  %1340 = vmatpush1.msra.mxu0 0.0
  %1341 = vmatprep.subr.mxu0 0.0
  %1342 = vmatpush1.msra.mxu0 0.0
  %1343 = vmatprep.subr.mxu0 0.0
  %1344 = vmatpush1.msra.mxu0 0.0
  %1345 = vmatprep.subr.mxu0 0.0
  %1346 = vmatpush1.msra.mxu0 0.0
  %1347 = vmatprep.subr.mxu0 0.0
  %1348 = vmatpush1.msra.mxu0 0.0
  %1349 = vmatprep.subr.mxu0 0.0
  %1350 = vmatpush1.msra.mxu0 0.0
  %1351 = vmatprep.subr.mxu0 0.0
  %1352 = vmatpush1.msra.mxu0 0.0
  %1353 = vmatprep.subr.mxu0 0.0
  %1354 = vmatpush1.msra.mxu0 0.0
  %1355 = vmatprep.subr.mxu0 0.0
  %1356 = vmatpush1.msra.mxu0 0.0
  %1357 = vmatprep.mubr.f32.mxu0 0.0
  %1358 = vmatmul.mubr.f32.gmra.mrb[0].mxu0 %v1206
  %v1359 = vpop.f32.mrb[0].mxu0
  %v1360 = vadd.f32 0.0, %v1359
  %v1361 = vpop.f32.mrb[0].mxu0
  %1362 = vdwg.mxu0
  %v1363 = vmul.f32 %v1290, 0.001953125
  %v1364 = vmul.f32 %v1360, 0.001953125
  %v1365 = vmul.f32 %v1363, %v1363
  %v1366 = vsub.f32 %v1364, %v1365
  %v1367 = vld [vmem:[%s5] sm:$0x1]
  %v1368 = vadd.f32 %v1366, 1e-05
  %v1369 = vrsqrt.pop %v1368
  %v1370 = vmul.f32 %v1367, %v1369
  %v1371 = vld [vmem:[%s6] sm:$0x1]
  %v1372 = vmul.f32 %v1363, %v1370
  %v1373 = vsub.f32 %v1371, %v1372
  %v1374 = vld [vmem:[%s8] sm:$0xff]
  %v1376 = vsel %vm659, %v1370, 0
  %1378 = vmatprep.subr.mxu0 0.0
  %1379 = vmatpush1.msra.mxu0 %v1374
  %1380 = vmatprep.subr.mxu0 0.0
  %1381 = vmatpush1.msra.mxu0 0.0
  %1382 = vmatprep.subr.mxu0 0.0
  %1383 = vmatpush1.msra.mxu0 0.0
  %1384 = vmatprep.subr.mxu0 0.0
  %1385 = vmatpush1.msra.mxu0 0.0
  %1386 = vmatprep.subr.mxu0 0.0
  %1387 = vmatpush1.msra.mxu0 0.0
  %1388 = vmatprep.subr.mxu0 0.0
  %1389 = vmatpush1.msra.mxu0 0.0
  %1390 = vmatprep.subr.mxu0 0.0
  %1391 = vmatpush1.msra.mxu0 0.0
  %1392 = vmatprep.subr.mxu0 0.0
  %1393 = vmatpush1.msra.mxu0 0.0
  %1394 = vmatprep.subr.mxu0 0.0
  %1395 = vmatpush1.msra.mxu0 0.0
  %1396 = vmatprep.subr.mxu0 0.0
  %1397 = vmatpush1.msra.mxu0 0.0
  %1398 = vmatprep.subr.mxu0 0.0
  %1399 = vmatpush1.msra.mxu0 0.0
  %1400 = vmatprep.subr.mxu0 0.0
  %1401 = vmatpush1.msra.mxu0 0.0
  %1402 = vmatprep.subr.mxu0 0.0
  %1403 = vmatpush1.msra.mxu0 0.0
  %1404 = vmatprep.subr.mxu0 0.0
  %1405 = vmatpush1.msra.mxu0 0.0
  %1406 = vmatprep.subr.mxu0 0.0
  %1407 = vmatpush1.msra.mxu0 0.0
  %1408 = vmatprep.subr.mxu0 0.0
  %1409 = vmatpush1.msra.mxu0 0.0
  %1410 = vmatprep.subr.mxu0 0.0
  %1411 = vmatpush1.msra.mxu0 0.0
  %1412 = vmatprep.subr.mxu0 0.0
  %1413 = vmatpush1.msra.mxu0 0.0
  %1414 = vmatprep.subr.mxu0 0.0
  %1415 = vmatpush1.msra.mxu0 0.0
  %1416 = vmatprep.subr.mxu0 0.0
  %1417 = vmatpush1.msra.mxu0 0.0
  %1418 = vmatprep.subr.mxu0 0.0
  %1419 = vmatpush1.msra.mxu0 0.0
  %1420 = vmatprep.subr.mxu0 0.0
  %1421 = vmatpush1.msra.mxu0 0.0
  %1422 = vmatprep.subr.mxu0 0.0
  %1423 = vmatpush1.msra.mxu0 0.0
  %1424 = vmatprep.subr.mxu0 0.0
  %1425 = vmatpush1.msra.mxu0 0.0
  %1426 = vmatprep.subr.mxu0 0.0
  %1427 = vmatpush1.msra.mxu0 0.0
  %1428 = vmatprep.subr.mxu0 0.0
  %1429 = vmatpush1.msra.mxu0 0.0
  %1430 = vmatprep.subr.mxu0 0.0
  %1431 = vmatpush1.msra.mxu0 0.0
  %1432 = vmatprep.subr.mxu0 0.0
  %1433 = vmatpush1.msra.mxu0 0.0
  %1434 = vmatprep.subr.mxu0 0.0
  %1435 = vmatpush1.msra.mxu0 0.0
  %1436 = vmatprep.subr.mxu0 0.0
  %1437 = vmatpush1.msra.mxu0 0.0
  %1438 = vmatprep.subr.mxu0 0.0
  %1439 = vmatpush1.msra.mxu0 0.0
  %1440 = vmatprep.subr.mxu0 0.0
  %1441 = vmatpush1.msra.mxu0 0.0
  %1442 = vmatprep.mubr.f32.mxu0 0.0
  %1443 = vmatmul.mubr.f32.gmra.mrb[0].mxu0 %v1376
  %v1444 = vpop.f32.mrb[0].mxu0
  %v1445 = vadd.f32 0.0, %v1444
  %v1446 = vpop.f32.mrb[0].mxu0
  %1447 = vdwg.mxu0
  %v1449 = vsel %vm659, %v1373, 0
  %1451 = vmatprep.subr.mxu0 0.0
  %1452 = vmatpush1.msra.mxu0 %v1374
  %1453 = vmatprep.subr.mxu0 0.0
  %1454 = vmatpush1.msra.mxu0 0.0
  %1455 = vmatprep.subr.mxu0 0.0
  %1456 = vmatpush1.msra.mxu0 0.0
  %1457 = vmatprep.subr.mxu0 0.0
  %1458 = vmatpush1.msra.mxu0 0.0
  %1459 = vmatprep.subr.mxu0 0.0
  %1460 = vmatpush1.msra.mxu0 0.0
  %1461 = vmatprep.subr.mxu0 0.0
  %1462 = vmatpush1.msra.mxu0 0.0
  %1463 = vmatprep.subr.mxu0 0.0
  %1464 = vmatpush1.msra.mxu0 0.0
  %1465 = vmatprep.subr.mxu0 0.0
  %1466 = vmatpush1.msra.mxu0 0.0
  %1467 = vmatprep.subr.mxu0 0.0
  %1468 = vmatpush1.msra.mxu0 0.0
  %1469 = vmatprep.subr.mxu0 0.0
  %1470 = vmatpush1.msra.mxu0 0.0
  %1471 = vmatprep.subr.mxu0 0.0
  %1472 = vmatpush1.msra.mxu0 0.0
  %1473 = vmatprep.subr.mxu0 0.0
  %1474 = vmatpush1.msra.mxu0 0.0
  %1475 = vmatprep.subr.mxu0 0.0
  %1476 = vmatpush1.msra.mxu0 0.0
  %1477 = vmatprep.subr.mxu0 0.0
  %1478 = vmatpush1.msra.mxu0 0.0
  %1479 = vmatprep.subr.mxu0 0.0
  %1480 = vmatpush1.msra.mxu0 0.0
  %1481 = vmatprep.subr.mxu0 0.0
  %1482 = vmatpush1.msra.mxu0 0.0
  %1483 = vmatprep.subr.mxu0 0.0
  %1484 = vmatpush1.msra.mxu0 0.0
  %1485 = vmatprep.subr.mxu0 0.0
  %1486 = vmatpush1.msra.mxu0 0.0
  %1487 = vmatprep.subr.mxu0 0.0
  %1488 = vmatpush1.msra.mxu0 0.0
  %1489 = vmatprep.subr.mxu0 0.0
  %1490 = vmatpush1.msra.mxu0 0.0
  %1491 = vmatprep.subr.mxu0 0.0
  %1492 = vmatpush1.msra.mxu0 0.0
  %1493 = vmatprep.subr.mxu0 0.0
  %1494 = vmatpush1.msra.mxu0 0.0
  %1495 = vmatprep.subr.mxu0 0.0
  %1496 = vmatpush1.msra.mxu0 0.0
  %1497 = vmatprep.subr.mxu0 0.0
  %1498 = vmatpush1.msra.mxu0 0.0
  %1499 = vmatprep.subr.mxu0 0.0
  %1500 = vmatpush1.msra.mxu0 0.0
  %1501 = vmatprep.subr.mxu0 0.0
  %1502 = vmatpush1.msra.mxu0 0.0
  %1503 = vmatprep.subr.mxu0 0.0
  %1504 = vmatpush1.msra.mxu0 0.0
  %1505 = vmatprep.subr.mxu0 0.0
  %1506 = vmatpush1.msra.mxu0 0.0
  %1507 = vmatprep.subr.mxu0 0.0
  %1508 = vmatpush1.msra.mxu0 0.0
  %1509 = vmatprep.subr.mxu0 0.0
  %1510 = vmatpush1.msra.mxu0 0.0
  %1511 = vmatprep.subr.mxu0 0.0
  %1512 = vmatpush1.msra.mxu0 0.0
  %1513 = vmatprep.subr.mxu0 0.0
  %1514 = vmatpush1.msra.mxu0 0.0
  %1515 = vmatprep.mubr.f32.mxu0 0.0
  %1516 = vmatmul.mubr.f32.gmra.mrb[0].mxu0 %v1449
  %v1517 = vpop.f32.mrb[0].mxu0
  %v1518 = vadd.f32 0.0, %v1517
  %v1519 = vpop.f32.mrb[0].mxu0
  %1520 = vdwg.mxu0
  %v1521 = vlaneseq
  %v1522 = vshrl.u32 %v1521, 7
  %v1523 = vsub.s32 0, %v1522
  %v1524 = vrot.slane %v1445, %v1523
  %v1525 = vmul.f32 %v1181, %v1524
  %v1526 = vmul.f32 %v1182, %v1524
  %v1527 = vmul.f32 %v1183, %v1524
  %v1528 = vmul.f32 %v1184, %v1524
  %v1529 = vlaneseq
  %v1530 = vshrl.u32 %v1529, 7
  %v1531 = vsub.s32 0, %v1530
  %v1532 = vrot.slane %v1518, %v1531
  %v1533 = vadd.f32 %v1525, %v1532
  %v1534 = vadd.f32 %v1526, %v1532
  %v1535 = vadd.f32 %v1527, %v1532
  %v1536 = vadd.f32 %v1528, %v1532
  %1537 = vst [vmem:[%s9] sm:$0xff] %v1533
  %1538 = vst [vmem:[%s9 + $0x8] sm:$0xff] %v1534
  %1539 = vst [vmem:[%s9 + $0x10] sm:$0xff] %v1535
  %1540 = vst [vmem:[%s9 + $0x18] sm:$0xff] %v1536
  // Predicated region
  $region38: #{basic_block_pallas.1} parent=0 // pred_check
    _
  $region39: #{basic_block_pallas.1} parent=0 // pred_check_branch
    %1542 = sbr.rel (0) target = $region41
  $region40: #{basic_block_pallas.1} parent=0 // pred_region
    _
  $region41: #{basic_block_pallas.1} parent=0 // pred_fallthru
    _
  // Predicated region
  $region42: #{basic_block_pallas.1} parent=0 // pred_check
    _
  $region43: #{basic_block_pallas.1} parent=0 // pred_check_branch
    %1544 = sbr.rel (0) target = $region45
  $region44: #{basic_block_pallas.1} parent=0 // pred_region
    _
  $region45: #{basic_block_pallas.1} parent=0 // pred_fallthru
    _

</llo_original>
